<compile_context>
chip_gen: v7x
topology: tpu7x:2x2x1
jax: 0.10.0
libtpu: 0.0.40
codegen_flags: <defaults>
</compile_context>

<pallas_src>
import functools

import jax
import jax.numpy as jnp
import numpy as np
from jax.experimental import pallas as pl
from jax.experimental.pallas import tpu as pltpu


# ----------------------------------------------------------------------------
# config helper (mirrors the PyTorch constructor)
# ----------------------------------------------------------------------------
def _conv_cfg(scale_factor: int):
    assert scale_factor == 1 or scale_factor % 2 == 0
    # The module hard-codes a 3-tap conv; only scale_factor in {1, 2} keeps the
    # conv output length equal to the nearest-downsampled mask length.
    assert scale_factor in (1, 2), \
        "3-tap MaskedConv1D only matches the mask length for scale_factor in {1, 2}"
    stride = scale_factor
    ksz_for_pad = stride + 1 if stride > 1 else 3   # only used to derive padding
    pad = ksz_for_pad // 2                          # == 1 for both supported cases
    return stride, pad


def _pick_tile_t(t_out: int, n_embd: int, stride: int) -> int:
    """Largest 128-multiple divisor of t_out whose f32 input tile is ~<=2 MiB."""
    budget = (2 * 1024 * 1024) // (4 * max(1, n_embd) * stride)
    for cand in (1024, 512, 256, 128):
        if cand <= budget and t_out % cand == 0:
            return cand
    return t_out   # small / odd t_out: single tile along time (block == full dim)


# ----------------------------------------------------------------------------
# fused kernel: depthwise 3-tap conv (stride s) + mask + channel LayerNorm
# ----------------------------------------------------------------------------
def _downsample_kernel(x_ref, halo_ref, m_ref, w_ref, g_ref, b_ref, o_ref,
                       ext_ref, *, stride, tile_t, eps):
    # x_ref   : (C, tile_in)   channel-major input block, tile_in = tile_t*stride
    # halo_ref: (2, C)         row 0: x[:, t0*tile_in - 1] (left halo, zeros @ tile 0)
    #                          row 1: x[:, (t0+1)*tile_in] (right halo, zeros @ last
    #                                 tile; only referenced when stride == 1)
    # m_ref   : (tile_t, 1)    0/1 mask for this tile's output positions
    # w_ref   : (3, C)         per-channel conv taps
    # g_ref   : (1, C)         LayerNorm weight     b_ref: (1, C) LayerNorm bias
    # o_ref   : (C, tile_t)    output block (lane-dense along time)
    # ext_ref : VMEM scratch (tile_in + 16, C): time-major extended window
    tile_in = tile_t * stride
    OFF = 8   # sublane-aligned offset of the main slab inside the scratch

    # Fold the NCT->NTC transpose into the kernel (XLU) instead of an HBM pass.
    xt = jnp.transpose(x_ref[...].astype(jnp.float32), (1, 0))       # (tile_in, C)
    halo = halo_ref[...].astype(jnp.float32)                         # (2, C)
    ext_ref[OFF - 1:OFF, :] = halo[0:1, :]                           # left halo row
    ext_ref[OFF:OFF + tile_in, :] = xt                               # aligned slab
    ext_ref[OFF + tile_in:OFF + tile_in + 1, :] = halo[1:2, :]       # right halo row

    w = w_ref[...].astype(jnp.float32)                               # (3, C)

    def tap(k):
        start = OFF - 1 + k
        if stride == 1:
            return ext_ref[pl.ds(start, tile_t), :]
        # strided sublane read of a VMEM-resident scratch: cheap filler while
        # the kernel is HBM bound.
        return ext_ref[pl.ds(start, tile_t, stride=stride), :]

    # depthwise cross-correlation: out[t, c] = sum_k w[k, c] * x[c, t*stride + k - 1]
    y = tap(0) * w[0:1, :] + tap(1) * w[1:2, :] + tap(2) * w[2:3, :]  # (tile_t, C)

    # MaskedConv1D: multiply by the (detached) downsampled mask
    y = y * m_ref[...]                                               # (tile_t,1) bcast

    # LayerNorm over channels (lane reduction) + per-channel affine; rsqrt -> EUP
    mu = jnp.mean(y, axis=-1, keepdims=True)
    d = y - mu
    var = jnp.mean(d * d, axis=-1, keepdims=True)
    yn = d * jax.lax.rsqrt(var + eps) * g_ref[...].astype(jnp.float32) \
         + b_ref[...].astype(jnp.float32)

    # transpose back (XLU) and store a lane-dense (C, tile_t) slab
    o_ref[...] = jnp.transpose(yn, (1, 0)).astype(o_ref.dtype)


# ----------------------------------------------------------------------------
# wrapper
# ----------------------------------------------------------------------------
def downsample_pyramid_levels(x, mask, conv_w, ln_g, ln_b, *, scale_factor,
                              eps=1e-5, tile_t=None):
    """x: (B, C, T) f32/bf16, mask: (B, 1, T) bool, conv_w: (C, 1, 3) torch layout,
    ln_g / ln_b: (C,).  Returns (y, out_mask) with y: (B, C, T_out) in x.dtype."""
    B, C, T = x.shape
    stride, pad = _conv_cfg(scale_factor)
    assert pad == 1
    assert T % stride == 0, "MaskedConv1D requires T to be a multiple of the stride"
    t_out = (T + 2 * pad - 3) // stride + 1
    assert t_out == T // stride

    if tile_t is None:
        tile_t = _pick_tile_t(t_out, C, stride)
    assert t_out % tile_t == 0
    assert tile_t == t_out or tile_t % 128 == 0, "time tile must be 128-aligned"
    n_t = t_out // tile_t
    tile_in = tile_t * stride

    # ---- tiny plain-JAX glue (no full-size HBM round trips) -----------------
    # nearest-neighbour mask downsample (== every stride-th column, T % s == 0)
    out_mask = mask[:, :, ::stride] if stride > 1 else mask           # (B,1,t_out)
    m_f = out_mask.astype(jnp.float32).reshape(B, t_out, 1)           # (B,t_out,1)

    # per-tile halo columns (1 per side, O(B*C*n_t) elements -> negligible HBM)
    zcol = jnp.zeros((B, C, 1), dtype=x.dtype)
    if n_t > 1:
        li = np.arange(1, n_t) * tile_in - 1
        lh = jnp.concatenate([zcol, x[:, :, li]], axis=2)             # (B, C, n_t)
    else:
        lh = zcol
    if stride == 1 and n_t > 1:
        ri = np.arange(1, n_t) * tile_in
        rh = jnp.concatenate([x[:, :, ri], zcol], axis=2)             # (B, C, n_t)
    else:
        rh = jnp.zeros((B, C, n_t), dtype=x.dtype)   # right halo unused for stride>1
    halos = jnp.stack([jnp.transpose(lh, (0, 2, 1)),
                       jnp.transpose(rh, (0, 2, 1))], axis=2)         # (B,n_t,2,C)

    w_taps = jnp.transpose(conv_w[:, 0, :], (1, 0)).astype(jnp.float32)   # (3, C)
    g = ln_g.reshape(1, C).astype(jnp.float32)
    b = ln_b.reshape(1, C).astype(jnp.float32)

    kernel = functools.partial(_downsample_kernel, stride=stride,
                               tile_t=tile_t, eps=float(eps))

    itm = x.dtype.itemsize
    cost = pl.CostEstimate(
        flops=int(B) * int(t_out) * int(C) * 14,
        transcendentals=int(B) * int(t_out),
        bytes_accessed=int(B * C * T * itm + B * C * t_out * itm
                           + halos.size * itm + m_f.size * 4
                           + (w_taps.size + 2 * C) * 4),
    )

    y = pl.pallas_call(
        kernel,
        out_shape=jax.ShapeDtypeStruct((B, C, t_out), x.dtype),
        grid=(B, n_t),
        in_specs=[
            pl.BlockSpec((None, C, tile_in), lambda bi, ti: (bi, 0, ti)),      # x
            pl.BlockSpec((None, None, 2, C), lambda bi, ti: (bi, ti, 0, 0)),   # halos
            pl.BlockSpec((None, tile_t, 1), lambda bi, ti: (bi, ti, 0)),       # mask
            pl.BlockSpec((3, C), lambda bi, ti: (0, 0)),                       # taps
            pl.BlockSpec((1, C), lambda bi, ti: (0, 0)),                       # LN w
            pl.BlockSpec((1, C), lambda bi, ti: (0, 0)),                       # LN b
        ],
        out_specs=pl.BlockSpec((None, C, tile_t), lambda bi, ti: (bi, 0, ti)),
        scratch_shapes=[pltpu.VMEM((tile_in + 16, C), jnp.float32)],
        compiler_params=pltpu.CompilerParams(
            dimension_semantics=("parallel", "parallel")),
        cost_estimate=cost,
    )(x, halos, m_f, w_taps, g, b)

    return y, out_mask


# ----------------------------------------------------------------------------
# pure-JAX reference (mirrors the PyTorch forward exactly)
# ----------------------------------------------------------------------------
def reference_forward(x, mask, conv_w, ln_g, ln_b, *, scale_factor, eps=1e-5):
    B, C, T = x.shape
    stride, pad = _conv_cfg(scale_factor)
    out = jax.lax.conv_general_dilated(
        x.astype(jnp.float32), conv_w.astype(jnp.float32),
        window_strides=(stride,), padding=[(pad, pad)],
        dimension_numbers=("NCH", "OIH", "NCH"),
        feature_group_count=C)                                        # (B, C, T_out)
    out_mask = (mask[:, :, ::stride] if stride > 1 else mask).astype(jnp.float32)
    out = out * out_mask
    mu = out.mean(axis=1, keepdims=True)
    var = ((out - mu) ** 2).mean(axis=1, keepdims=True)
    y = (out - mu) / jnp.sqrt(var + eps)
    y = y * ln_g.reshape(1, C, 1) + ln_b.reshape(1, C, 1)
    return y, out_mask.astype(bool)


# ----------------------------------------------------------------------------
# main
# ----------------------------------------------------------------------------
if __name__ == "__main__":
    B, C, T = 2, 128, 512            # n_embd = 128, seq len 512, batch 2

    key = jax.random.PRNGKey(0)
    k1, k2, k3, k4 = jax.random.split(key, 4)
    x = jax.random.normal(k1, (B, C, T), dtype=jnp.float32)
    lengths = jnp.array([T, 300], dtype=jnp.int32)
    mask = jnp.arange(T)[None, None, :] < lengths[:, None, None]      # (B,1,T) bool
    conv_w = 0.3 * jax.random.normal(k2, (C, 1, 3), dtype=jnp.float32)
    ln_g = 1.0 + 0.1 * jax.random.normal(k3, (C,), dtype=jnp.float32)
    ln_b = 0.1 * jax.random.normal(k4, (C,), dtype=jnp.float32)

    for scale_factor in (2, 1):      # downsample-by-2 and stride-1 variants
        y_ref, m_ref = reference_forward(x, mask, conv_w, ln_g, ln_b,
                                         scale_factor=scale_factor)
        y_ref = jax.block_until_ready(y_ref)
        for forced_tile in (None, 128):   # auto tile, and multi-tile (halo) path
            y, m_out = downsample_pyramid_levels(
                x, mask, conv_w, ln_g, ln_b,
                scale_factor=scale_factor, tile_t=forced_tile)
            y = jax.block_until_ready(y)
            np.testing.assert_allclose(np.asarray(y), np.asarray(y_ref),
                                       rtol=1e-3, atol=1e-3)
            np.testing.assert_array_equal(np.asarray(m_out), np.asarray(m_ref))

    # bf16 I/O path (perf feedback): halves HBM traffic, math stays f32 in-kernel
    y_bf, _ = downsample_pyramid_levels(
        x.astype(jnp.bfloat16), mask, conv_w, ln_g, ln_b,
        scale_factor=2, tile_t=128)
    y_bf = jax.block_until_ready(y_bf)
    y_ref2, _ = reference_forward(x, mask, conv_w, ln_g, ln_b, scale_factor=2)
    np.testing.assert_allclose(np.asarray(y_bf.astype(jnp.float32)),
                               np.asarray(y_ref2), rtol=0.15, atol=0.15)

    print("KERNEL_OK")
</pallas_src>

<mosaic_0001>
module attributes {stable_mosaic.version = 11 : i64} {
  func.func @_downsample_kernel(%arg0: i32, %arg1: i32, %arg2: memref<1x128x512xf32, #tpu.memory_space<vmem>>, %arg3: memref<1x1x2x128xf32, #tpu.memory_space<vmem>>, %arg4: memref<1x256x1xf32, #tpu.memory_space<vmem>>, %arg5: memref<3x128xf32, #tpu.memory_space<vmem>>, %arg6: memref<1x128xf32, #tpu.memory_space<vmem>>, %arg7: memref<1x128xf32, #tpu.memory_space<vmem>>, %arg8: memref<1x128x256xf32, #tpu.memory_space<vmem>>, %arg9: memref<528x128xf32, #tpu.memory_space<vmem>>) attributes {dimension_semantics = [#tpu.dimension_semantics<parallel>, #tpu.dimension_semantics<parallel>], iteration_bounds = array<i64: 2, 1>, scalar_prefetch = 0 : i64, scratch_operands = 1 : i64, tpu.core_type = #tpu.core_type<tc>, window_params = [{transform_indices = @transform_0, window_bounds = array<i64: 1, 128, 512>}, {transform_indices = @transform_1, window_bounds = array<i64: 1, 1, 2, 128>}, {transform_indices = @transform_2, window_bounds = array<i64: 1, 256, 1>}, {pipeline_mode = #tpu.pipeline_mode<synchronous>, transform_indices = @transform_3, window_bounds = array<i64: 3, 128>}, {pipeline_mode = #tpu.pipeline_mode<synchronous>, transform_indices = @transform_4, window_bounds = array<i64: 1, 128>}, {pipeline_mode = #tpu.pipeline_mode<synchronous>, transform_indices = @transform_5, window_bounds = array<i64: 1, 128>}, {transform_indices = @transform_6, window_bounds = array<i64: 1, 128, 256>}]} {
    %c0 = arith.constant 0 : index
    %c0_0 = arith.constant 0 : index
    %c0_1 = arith.constant 0 : index
    %0 = vector.load %arg2[%c0, %c0_0, %c0_1] : memref<1x128x512xf32, #tpu.memory_space<vmem>>, vector<1x128x512xf32>
    %1 = vector.shape_cast %0 : vector<1x128x512xf32> to vector<128x512xf32>
    %2 = tpu.transpose %1, [1, 0] : vector<128x512xf32> -> vector<512x128xf32>
    %c0_2 = arith.constant 0 : index
    %c0_3 = arith.constant 0 : index
    %c0_4 = arith.constant 0 : index
    %c0_5 = arith.constant 0 : index
    %3 = vector.load %arg3[%c0_2, %c0_3, %c0_4, %c0_5] : memref<1x1x2x128xf32, #tpu.memory_space<vmem>>, vector<1x1x2x128xf32>
    %4 = vector.shape_cast %3 : vector<1x1x2x128xf32> to vector<2x128xf32>
    %5 = vector.extract_strided_slice %4 {offsets = [0, 0], sizes = [1, 128], strides = [1, 1]} : vector<2x128xf32> to vector<1x128xf32>
    %c7 = arith.constant 7 : index
    %c0_6 = arith.constant 0 : index
    %6 = vector.load %arg9[%c7, %c0_6] : memref<528x128xf32, #tpu.memory_space<vmem>>, vector<1x128xf32>
    tpu.vector_store %arg9[%c7, %c0_6], %5 {strides = array<i32>} : memref<528x128xf32, #tpu.memory_space<vmem>>, vector<1x128xf32>,
    %c8 = arith.constant 8 : index
    %c0_7 = arith.constant 0 : index
    %7 = vector.load %arg9[%c8, %c0_7] : memref<528x128xf32, #tpu.memory_space<vmem>>, vector<512x128xf32>
    tpu.vector_store %arg9[%c8, %c0_7], %2 {strides = array<i32>} : memref<528x128xf32, #tpu.memory_space<vmem>>, vector<512x128xf32>,
    %8 = vector.extract_strided_slice %4 {offsets = [1, 0], sizes = [1, 128], strides = [1, 1]} : vector<2x128xf32> to vector<1x128xf32>
    %c520 = arith.constant 520 : index
    %c0_8 = arith.constant 0 : index
    %9 = vector.load %arg9[%c520, %c0_8] : memref<528x128xf32, #tpu.memory_space<vmem>>, vector<1x128xf32>
    tpu.vector_store %arg9[%c520, %c0_8], %8 {strides = array<i32>} : memref<528x128xf32, #tpu.memory_space<vmem>>, vector<1x128xf32>,
    %c0_9 = arith.constant 0 : index
    %c0_10 = arith.constant 0 : index
    %10 = vector.load %arg5[%c0_9, %c0_10] : memref<3x128xf32, #tpu.memory_space<vmem>>, vector<3x128xf32>
    %c7_11 = arith.constant 7 : index
    %c0_12 = arith.constant 0 : index
    %11 = tpu.strided_load %arg9[%c7_11, %c0_12] {strides = array<i32: 2, 1>} : memref<528x128xf32, #tpu.memory_space<vmem>>, vector<256x128xf32>
    %12 = vector.extract_strided_slice %10 {offsets = [0, 0], sizes = [1, 128], strides = [1, 1]} : vector<3x128xf32> to vector<1x128xf32>
    %13 = vector.broadcast %12 : vector<1x128xf32> to vector<256x128xf32>
    %14 = arith.mulf %11, %13 : vector<256x128xf32>
    %c8_13 = arith.constant 8 : index
    %c0_14 = arith.constant 0 : index
    %15 = tpu.strided_load %arg9[%c8_13, %c0_14] {strides = array<i32: 2, 1>} : memref<528x128xf32, #tpu.memory_space<vmem>>, vector<256x128xf32>
    %16 = vector.extract_strided_slice %10 {offsets = [1, 0], sizes = [1, 128], strides = [1, 1]} : vector<3x128xf32> to vector<1x128xf32>
    %17 = vector.broadcast %16 : vector<1x128xf32> to vector<256x128xf32>
    %18 = arith.mulf %15, %17 : vector<256x128xf32>
    %19 = arith.addf %14, %18 : vector<256x128xf32>
    %c9 = arith.constant 9 : index
    %c0_15 = arith.constant 0 : index
    %20 = tpu.strided_load %arg9[%c9, %c0_15] {strides = array<i32: 2, 1>} : memref<528x128xf32, #tpu.memory_space<vmem>>, vector<256x128xf32>
    %21 = vector.extract_strided_slice %10 {offsets = [2, 0], sizes = [1, 128], strides = [1, 1]} : vector<3x128xf32> to vector<1x128xf32>
    %22 = vector.broadcast %21 : vector<1x128xf32> to vector<256x128xf32>
    %23 = arith.mulf %20, %22 : vector<256x128xf32>
    %24 = arith.addf %19, %23 : vector<256x128xf32>
    %c0_16 = arith.constant 0 : index
    %c0_17 = arith.constant 0 : index
    %c0_18 = arith.constant 0 : index
    %25 = vector.load %arg4[%c0_16, %c0_17, %c0_18] : memref<1x256x1xf32, #tpu.memory_space<vmem>>, vector<1x256x1xf32>
    %26 = vector.shape_cast %25 : vector<1x256x1xf32> to vector<256x1xf32>
    %27 = vector.broadcast %26 : vector<256x1xf32> to vector<256x128xf32>
    %28 = arith.mulf %24, %27 : vector<256x128xf32>
    %cst = arith.constant dense<0.000000e+00> : vector<256xf32>
    %29 = vector.multi_reduction <add>, %28, %cst [1] : vector<256x128xf32> to vector<256xf32>
    %30 = vector.shape_cast %29 : vector<256xf32> to vector<256x1xf32>
    %cst_19 = arith.constant 1.280000e+02 : f32
    %31 = vector.broadcast %cst_19 : f32 to vector<256x1xf32>
    %32 = arith.divf %30, %31 : vector<256x1xf32>
    %33 = vector.broadcast %32 : vector<256x1xf32> to vector<256x128xf32>
    %34 = arith.subf %28, %33 : vector<256x128xf32>
    %35 = arith.mulf %34, %34 : vector<256x128xf32>
    %cst_20 = arith.constant dense<0.000000e+00> : vector<256xf32>
    %36 = vector.multi_reduction <add>, %35, %cst_20 [1] : vector<256x128xf32> to vector<256xf32>
    %37 = vector.shape_cast %36 : vector<256xf32> to vector<256x1xf32>
    %cst_21 = arith.constant 1.280000e+02 : f32
    %38 = vector.broadcast %cst_21 : f32 to vector<256x1xf32>
    %39 = arith.divf %37, %38 : vector<256x1xf32>
    %cst_22 = arith.constant 9.99999974E-6 : f32
    %40 = vector.broadcast %cst_22 : f32 to vector<256x1xf32>
    %41 = arith.addf %39, %40 : vector<256x1xf32>
    %42 = math.rsqrt %41 : vector<256x1xf32>
    %43 = vector.broadcast %42 : vector<256x1xf32> to vector<256x128xf32>
    %44 = arith.mulf %34, %43 : vector<256x128xf32>
    %c0_23 = arith.constant 0 : index
    %c0_24 = arith.constant 0 : index
    %45 = vector.load %arg6[%c0_23, %c0_24] : memref<1x128xf32, #tpu.memory_space<vmem>>, vector<1x128xf32>
    %46 = vector.broadcast %45 : vector<1x128xf32> to vector<256x128xf32>
    %47 = arith.mulf %44, %46 : vector<256x128xf32>
    %c0_25 = arith.constant 0 : index
    %c0_26 = arith.constant 0 : index
    %48 = vector.load %arg7[%c0_25, %c0_26] : memref<1x128xf32, #tpu.memory_space<vmem>>, vector<1x128xf32>
    %49 = vector.broadcast %48 : vector<1x128xf32> to vector<256x128xf32>
    %50 = arith.addf %47, %49 : vector<256x128xf32>
    %51 = tpu.transpose %50, [1, 0] : vector<256x128xf32> -> vector<128x256xf32>
    %c0_27 = arith.constant 0 : index
    %c0_28 = arith.constant 0 : index
    %c0_29 = arith.constant 0 : index
    %52 = vector.load %arg8[%c0_27, %c0_28, %c0_29] : memref<1x128x256xf32, #tpu.memory_space<vmem>>, vector<1x128x256xf32>
    %53 = vector.shape_cast %52 : vector<1x128x256xf32> to vector<128x256xf32>
    %54 = vector.shape_cast %51 : vector<128x256xf32> to vector<1x128x256xf32>
    tpu.vector_store %arg8[%c0_27, %c0_28, %c0_29], %54 {strides = array<i32>} : memref<1x128x256xf32, #tpu.memory_space<vmem>>, vector<1x128x256xf32>,
    return
  }
  func.func @transform_0(%arg0: i32, %arg1: i32) -> (i32, i32, i32) {
    %c0_i32 = arith.constant 0 : i32
    %c0_i32_0 = arith.constant 0 : i32
    return %arg0, %c0_i32, %arg1 : i32, i32, i32
  }
  func.func @transform_1(%arg0: i32, %arg1: i32) -> (i32, i32, i32, i32) {
    %c0_i32 = arith.constant 0 : i32
    %c0_i32_0 = arith.constant 0 : i32
    %c0_i32_1 = arith.constant 0 : i32
    return %arg0, %arg1, %c0_i32, %c0_i32_0 : i32, i32, i32, i32
  }
  func.func @transform_2(%arg0: i32, %arg1: i32) -> (i32, i32, i32) {
    %c0_i32 = arith.constant 0 : i32
    %c0_i32_0 = arith.constant 0 : i32
    return %arg0, %arg1, %c0_i32 : i32, i32, i32
  }
  func.func @transform_3(%arg0: i32, %arg1: i32) -> (i32, i32) {
    %c0_i32 = arith.constant 0 : i32
    %c0_i32_0 = arith.constant 0 : i32
    %c0_i32_1 = arith.constant 0 : i32
    return %c0_i32, %c0_i32_0 : i32, i32
  }
  func.func @transform_4(%arg0: i32, %arg1: i32) -> (i32, i32) {
    %c0_i32 = arith.constant 0 : i32
    %c0_i32_0 = arith.constant 0 : i32
    %c0_i32_1 = arith.constant 0 : i32
    return %c0_i32, %c0_i32_0 : i32, i32
  }
  func.func @transform_5(%arg0: i32, %arg1: i32) -> (i32, i32) {
    %c0_i32 = arith.constant 0 : i32
    %c0_i32_0 = arith.constant 0 : i32
    %c0_i32_1 = arith.constant 0 : i32
    return %c0_i32, %c0_i32_0 : i32, i32
  }
  func.func @transform_6(%arg0: i32, %arg1: i32) -> (i32, i32, i32) {
    %c0_i32 = arith.constant 0 : i32
    %c0_i32_0 = arith.constant 0 : i32
    return %arg0, %c0_i32, %arg1 : i32, i32, i32
  }
}

</mosaic_0001>

<llo_original>
// kernel: tpu_custom_call.1
$region0: #{tpu_custom_call.1}
  #allocation0 [shape = 'u32[]', space=smem, size = 0x4, offset = 0x4, fixed_abs, tag = 'smem constant byte address 0x4 - core index']
  #allocation1 [shape = 'u32[144,128]{1,0:T(1,128)}', space=vmem, size = 0x12000, scoped, tag = 'internal scratch']
  #allocation2 [shape = 'f32[528,128]{1,0:T(8,128)}', space=vmem, size = 0x42000, scoped, tag = 'scratch operand']
  %s0 = inlined_call_operand.hbm [shape: f32[2,128,512], index: 0, kind: input, shape index: {}]
  %s1 = inlined_call_operand.vmem [shape: f32[2,1,2,128], index: 1, kind: input, shape index: {}]
  %s2 = inlined_call_operand.vmem [shape: f32[2,256,1], index: 2, kind: input, shape index: {}]
  %s3 = inlined_call_operand.vmem [shape: f32[3,128], index: 3, kind: input, shape index: {}]
  %s4 = inlined_call_operand.vmem [shape: f32[1,128], index: 4, kind: input, shape index: {}]
  %s5 = inlined_call_operand.vmem [shape: f32[1,128], index: 5, kind: input, shape index: {}]
  %s6 = inlined_call_operand.hbm [shape: f32[2,128,256], index: 6, kind: output, shape index: {}]
  %s7 = sld [smem:[#allocation0]]
  $region61: #{tpu_custom_call.1} parent=0
    _
  %s9 = ssub.s32 1, %s7
  %s10 = scalar_select 0, %s9, %s7
  $region1: #{tpu_custom_call.1} parent=0
    #allocation3 [shape = 'u8[524288]{0}', space=vmem, size = 0x80000, scoped, tag = 'input window, operand 0']
    #allocation4 [shape = 's32[2]{0}', space=sflag, size = 0x8, scoped, tag = 'scoped memory for tpu_custom_call.1']
    #allocation5 [shape = 's32[2]{0}', space=sflag, size = 0x8, scoped, tag = 'scoped memory for tpu_custom_call.1']
    #allocation6 [shape = 'u8[262144]{0}', space=vmem, size = 0x40000, scoped, tag = 'output window, operand 0']
    %11 = vsyncpa [#allocation4], 0
    %s12 = scalar_lea.sflag [#allocation4], 1
    %13 = vsyncpa %s12, 0
    %14 = vsyncpa [#allocation5], 0
    %s15 = scalar_lea.sflag [#allocation5], 1
    %16 = vsyncpa %s15, 0
    loop: start=0, step=1, limit=4
    $region2: #{tpu_custom_call.1} parent=1 // loop_pre_header
      _
    $region3: #{tpu_custom_call.1} parent=1 // loop_header
      %s18 = sphi 0, %s22
      %p19 = scmp.ge.s32.totalorder %s18, 4
      %s25 = sphi 0, %s37
      %s26 = sphi 0, %s33
      %s27 = sphi 0, %s25
      %s28 = sphi 0, %s26
      %s29 = sphi 0, %s27
      %s30 = sphi 0, %s28
      %s42 = sphi 0, %s44
      %s45 = sphi 0, %s42
      %s46 = sphi 0, %s45
      %s62 = sphi 0, %s46
      %s70 = sphi 0, %s72
      %s73 = sphi 0, %s70
      %s74 = sphi 0, %s73
      %s90 = sphi 0, %s74
      %s98 = sphi 0, %s100
      %s101 = sphi 0, %s98
      %s102 = sphi 0, %s101
      %s118 = sphi 0, %s102
      %s122 = sphi 0, %s122
      %s124 = sphi 0, %s122
      %s125 = sphi 0, %s124
      %s139 = sphi 0, %s125
      %s143 = sphi 0, %s143
      %s145 = sphi 0, %s143
      %s146 = sphi 0, %s145
      %s160 = sphi 0, %s146
      %s164 = sphi 0, %s164
      %s166 = sphi 0, %s164
      %s167 = sphi 0, %s166
      %s181 = sphi 0, %s167
      %s189 = sphi 0, %s191
      %s192 = sphi 0, %s189
      %s193 = sphi 0, %s192
      %s209 = sphi 0, %s193
    $region4: #{tpu_custom_call.1} parent=1 // loop_header_branch
      %21 = sbr.rel (%p19) target = $region8
    $region5: #{tpu_custom_call.1} parent=1 // loop_body
      %s23 = ssub.s32 %s18, 1
      %s24 = ssub.s32 %s18, 2
      %s31 = sadd.s32 1, %s26
      %p32 = scmp.ge.s32.totalorder %s31, 1
      %s33 = scalar_select %p32, 0, %s31
      %s34 = sadd.s32 1, %s25
      %s35 = scalar_select %p32, %s34, %s25
      %p36 = scmp.ge.s32.totalorder %s35, 2
      %s37 = scalar_select %p36, 0, %s35
      %s38 = ssub.s32 %s25, %s37
      %s39 = ssub.s32 %s26, %s33
      %s40 = sor.u32 %s38, %s39
      %p41 = scmp.eq.s32.totalorder %s40, 0
      %s43 = sadd.s32 %s42, 1
      %s44 = scalar_select %p41, %s42, %s43
      %p47 = pneg %p41
      %p48 = scmp.eq.s32.totalorder %s18, 1
      %p49 = por %p47, %p48
      %p50 = scmp.ne.s32.totalorder %s42, %s45
      %p51 = scmp.eq.s32.totalorder %s18, 0
      %p52 = por %p50, %p51
      %p53 = scmp.ne.s32.totalorder %s42, %s45
      %p54 = scmp.eq.s32.totalorder %s23, 1
      %p55 = por %p53, %p54
      %p56 = scmp.ne.s32.totalorder %s45, %s46
      %p57 = scmp.eq.s32.totalorder %s23, 0
      %p58 = por %p56, %p57
      %p59 = scmp.ne.s32.totalorder %s45, %s46
      %p60 = scmp.eq.s32.totalorder %s24, 1
      %p61 = por %p59, %p60
      %p63 = scmp.ne.s32.totalorder %s46, %s62
      %p64 = scmp.eq.s32.totalorder %s24, 0
      %p65 = por %p63, %p64
      %s66 = ssub.s32 %s25, %s37
      %s67 = ssub.s32 %s26, %s33
      %s68 = sor.u32 %s66, %s67
      %p69 = scmp.eq.s32.totalorder %s68, 0
      %s71 = sadd.s32 %s70, 1
      %s72 = scalar_select %p69, %s70, %s71
      %p75 = pneg %p69
      %p76 = scmp.eq.s32.totalorder %s18, 1
      %p77 = por %p75, %p76
      %p78 = scmp.ne.s32.totalorder %s70, %s73
      %p79 = scmp.eq.s32.totalorder %s18, 0
      %p80 = por %p78, %p79
      %p81 = scmp.ne.s32.totalorder %s70, %s73
      %p82 = scmp.eq.s32.totalorder %s23, 1
      %p83 = por %p81, %p82
      %p84 = scmp.ne.s32.totalorder %s73, %s74
      %p85 = scmp.eq.s32.totalorder %s23, 0
      %p86 = por %p84, %p85
      %p87 = scmp.ne.s32.totalorder %s73, %s74
      %p88 = scmp.eq.s32.totalorder %s24, 1
      %p89 = por %p87, %p88
      %p91 = scmp.ne.s32.totalorder %s74, %s90
      %p92 = scmp.eq.s32.totalorder %s24, 0
      %p93 = por %p91, %p92
      %s94 = ssub.s32 %s25, %s37
      %s95 = ssub.s32 %s26, %s33
      %s96 = sor.u32 %s94, %s95
      %p97 = scmp.eq.s32.totalorder %s96, 0
      %s99 = sadd.s32 %s98, 1
      %s100 = scalar_select %p97, %s98, %s99
      %p103 = pneg %p97
      %p104 = scmp.eq.s32.totalorder %s18, 1
      %p105 = por %p103, %p104
      %p106 = scmp.ne.s32.totalorder %s98, %s101
      %p107 = scmp.eq.s32.totalorder %s18, 0
      %p108 = por %p106, %p107
      %p109 = scmp.ne.s32.totalorder %s98, %s101
      %p110 = scmp.eq.s32.totalorder %s23, 1
      %p111 = por %p109, %p110
      %p112 = scmp.ne.s32.totalorder %s101, %s102
      %p113 = scmp.eq.s32.totalorder %s23, 0
      %p114 = por %p112, %p113
      %p115 = scmp.ne.s32.totalorder %s101, %s102
      %p116 = scmp.eq.s32.totalorder %s24, 1
      %p117 = por %p115, %p116
      %p119 = scmp.ne.s32.totalorder %s102, %s118
      %p120 = scmp.eq.s32.totalorder %s24, 0
      %p121 = por %p119, %p120
      %s123 = sadd.s32 %s122, 1
      %p126 = scmp.eq.s32.totalorder %s18, 1
      %p127 = scmp.ne.s32.totalorder %s122, %s124
      %p128 = scmp.eq.s32.totalorder %s18, 0
      %p129 = por %p127, %p128
      %p130 = scmp.ne.s32.totalorder %s122, %s124
      %p131 = scmp.eq.s32.totalorder %s23, 1
      %p132 = por %p130, %p131
      %p133 = scmp.ne.s32.totalorder %s124, %s125
      %p134 = scmp.eq.s32.totalorder %s23, 0
      %p135 = por %p133, %p134
      %p136 = scmp.ne.s32.totalorder %s124, %s125
      %p137 = scmp.eq.s32.totalorder %s24, 1
      %p138 = por %p136, %p137
      %p140 = scmp.ne.s32.totalorder %s125, %s139
      %p141 = scmp.eq.s32.totalorder %s24, 0
      %p142 = por %p140, %p141
      %s144 = sadd.s32 %s143, 1
      %p147 = scmp.eq.s32.totalorder %s18, 1
      %p148 = scmp.ne.s32.totalorder %s143, %s145
      %p149 = scmp.eq.s32.totalorder %s18, 0
      %p150 = por %p148, %p149
      %p151 = scmp.ne.s32.totalorder %s143, %s145
      %p152 = scmp.eq.s32.totalorder %s23, 1
      %p153 = por %p151, %p152
      %p154 = scmp.ne.s32.totalorder %s145, %s146
      %p155 = scmp.eq.s32.totalorder %s23, 0
      %p156 = por %p154, %p155
      %p157 = scmp.ne.s32.totalorder %s145, %s146
      %p158 = scmp.eq.s32.totalorder %s24, 1
      %p159 = por %p157, %p158
      %p161 = scmp.ne.s32.totalorder %s146, %s160
      %p162 = scmp.eq.s32.totalorder %s24, 0
      %p163 = por %p161, %p162
      %s165 = sadd.s32 %s164, 1
      %p168 = scmp.eq.s32.totalorder %s18, 1
      %p169 = scmp.ne.s32.totalorder %s164, %s166
      %p170 = scmp.eq.s32.totalorder %s18, 0
      %p171 = por %p169, %p170
      %p172 = scmp.ne.s32.totalorder %s164, %s166
      %p173 = scmp.eq.s32.totalorder %s23, 1
      %p174 = por %p172, %p173
      %p175 = scmp.ne.s32.totalorder %s166, %s167
      %p176 = scmp.eq.s32.totalorder %s23, 0
      %p177 = por %p175, %p176
      %p178 = scmp.ne.s32.totalorder %s166, %s167
      %p179 = scmp.eq.s32.totalorder %s24, 1
      %p180 = por %p178, %p179
      %p182 = scmp.ne.s32.totalorder %s167, %s181
      %p183 = scmp.eq.s32.totalorder %s24, 0
      %p184 = por %p182, %p183
      %s185 = ssub.s32 %s25, %s37
      %s186 = ssub.s32 %s26, %s33
      %s187 = sor.u32 %s185, %s186
      %p188 = scmp.eq.s32.totalorder %s187, 0
      %s190 = sadd.s32 %s189, 1
      %s191 = scalar_select %p188, %s189, %s190
      %p194 = pneg %p188
      %p195 = scmp.eq.s32.totalorder %s18, 1
      %p196 = por %p194, %p195
      %p197 = scmp.ne.s32.totalorder %s189, %s192
      %p198 = scmp.eq.s32.totalorder %s18, 0
      %p199 = por %p197, %p198
      %p200 = scmp.ne.s32.totalorder %s189, %s192
      %p201 = scmp.eq.s32.totalorder %s23, 1
      %p202 = por %p200, %p201
      %p203 = scmp.ne.s32.totalorder %s192, %s193
      %p204 = scmp.eq.s32.totalorder %s23, 0
      %p205 = por %p203, %p204
      %p206 = scmp.ne.s32.totalorder %s192, %s193
      %p207 = scmp.eq.s32.totalorder %s24, 1
      %p208 = por %p206, %p207
      %p210 = scmp.ne.s32.totalorder %s193, %s209
      %p211 = scmp.eq.s32.totalorder %s24, 0
      %p212 = por %p210, %p211
      %p213 = scmp.le.s32.totalorder 1, %s18
      %p214 = scmp.lt.s32.totalorder %s18, 3
      %p215 = pnand %p213, %p214
      %p216 = pneg %p215
      // Predicated region
      $region9: #{tpu_custom_call.1} parent=5 // pred_check
        _
      $region10: #{tpu_custom_call.1} parent=5 // pred_check_branch
        %218 = sbr.rel (%p215) target = $region12
      $region11: #{tpu_custom_call.1} parent=5 // pred_region
        %s219 = ssub.s32 %s18, 1
        // Predicated region
        $region13: #{tpu_custom_call.1} parent=11 // pred_check
          %p220 = pneg %p135
        $region14: #{tpu_custom_call.1} parent=11 // pred_check_branch
          %222 = sbr.rel (%p220) target = $region16
        $region15: #{tpu_custom_call.1} parent=11 // pred_region
          _
        $region16: #{tpu_custom_call.1} parent=11 // pred_fallthru
          _
        // Predicated region
        $region17: #{tpu_custom_call.1} parent=11 // pred_check
          %p223 = pneg %p156
        $region18: #{tpu_custom_call.1} parent=11 // pred_check_branch
          %225 = sbr.rel (%p223) target = $region20
        $region19: #{tpu_custom_call.1} parent=11 // pred_region
          _
        $region20: #{tpu_custom_call.1} parent=11 // pred_fallthru
          _
        // Predicated region
        $region21: #{tpu_custom_call.1} parent=11 // pred_check
          %p226 = pneg %p177
        $region22: #{tpu_custom_call.1} parent=11 // pred_check_branch
          %228 = sbr.rel (%p226) target = $region24
        $region23: #{tpu_custom_call.1} parent=11 // pred_region
          _
        $region24: #{tpu_custom_call.1} parent=11 // pred_fallthru
          _
      $region12: #{tpu_custom_call.1} parent=5 // pred_fallthru
        _
      %p229 = scmp.lt.s32.totalorder %s18, 2
      // Predicated region
      $region25: #{tpu_custom_call.1} parent=5 // pred_check
        %p230 = pneg %p229
      $region26: #{tpu_custom_call.1} parent=5 // pred_check_branch
        %232 = sbr.rel (%p230) target = $region28
      $region27: #{tpu_custom_call.1} parent=5 // pred_region
        // Predicated region
        $region29: #{tpu_custom_call.1} parent=27 // pred_check
          %p233 = pneg %p52
        $region30: #{tpu_custom_call.1} parent=27 // pred_check_branch
          %235 = sbr.rel (%p233) target = $region32
        $region31: #{tpu_custom_call.1} parent=27 // pred_region
          %s236 = sand.u32 %s42, 1
          %s237 = scalar_lea.sflag [#allocation4], %s236
          %s238 = sand.u32 %s42, 1
          %s239 = smul.addr %s238, 512
          %s240 = scalar_lea.vmem [#allocation3], %s239
          %s241 = smul.u32 4, %s26
          %s243 = ssub.s32 8192, 8192
          %244 = vsyncadd %s237, %s243
          %s245 = smul.addr %s25, 64
          %s246 = sadd.s32 %s241, %s245
          %s247 = smul.addr %s246, 128
          %s248 = scalar_lea.hbm %s0, %s247
          %s249 = sshll.u32 %s240, 4
          %s250 = int_to_ptr.vmem [resolvable:$true] %s249
          %255 = dma.hbm_to_vmem [thread:$0]  %s248, 8192, %s250, %s237, 512, 512, 32
        $region32: #{tpu_custom_call.1} parent=27 // pred_fallthru
          _
        // Predicated region
        $region33: #{tpu_custom_call.1} parent=27 // pred_check
          %p256 = pneg %p80
        $region34: #{tpu_custom_call.1} parent=27 // pred_check_branch
          %258 = sbr.rel (%p256) target = $region36
        $region35: #{tpu_custom_call.1} parent=27 // pred_region
          %p259 = scmp.lt.s32.totalorder %s25, 1
          %s260 = scalar_select %p259, %s25, 1
          %p261 = scmp.lt.s32.totalorder %s26, 0
          %s262 = scalar_select %p261, %s26, 0
          %s263 = sadd.s32 %s262, %s260
          %s264 = smul.addr %s263, 2
          %s265 = scalar_lea.vmem %s1, %s264
        $region36: #{tpu_custom_call.1} parent=27 // pred_fallthru
          _
        // Predicated region
        $region37: #{tpu_custom_call.1} parent=27 // pred_check
          %p266 = pneg %p108
        $region38: #{tpu_custom_call.1} parent=27 // pred_check_branch
          %268 = sbr.rel (%p266) target = $region40
        $region39: #{tpu_custom_call.1} parent=27 // pred_region
          %s269 = smul.u32 32, %s26
          %p270 = scmp.lt.s32.totalorder %s25, 1
          %s271 = scalar_select %p270, %s25, 1
          %p272 = scmp.lt.s32.totalorder %s269, 31
          %s273 = scalar_select %p272, %s269, 31
          %s274 = smul.addr %s271, 32
          %s275 = sadd.s32 %s273, %s274
          %s276 = smul.addr %s275, 8
          %s277 = scalar_lea.vmem %s2, %s276
          %s278 = smul.u32 32, %s26
        $region40: #{tpu_custom_call.1} parent=27 // pred_fallthru
          _
      $region28: #{tpu_custom_call.1} parent=5 // pred_fallthru
        _
      %p279 = scmp.le.s32.totalorder 1, %s18
      %p280 = scmp.lt.s32.totalorder %s18, 3
      %p281 = pnand %p279, %p280
      %p282 = pneg %p281
      // Predicated region
      $region41: #{tpu_custom_call.1} parent=5 // pred_check
        _
      $region42: #{tpu_custom_call.1} parent=5 // pred_check_branch
        %284 = sbr.rel (%p281) target = $region44
      $region43: #{tpu_custom_call.1} parent=5 // pred_region
        %s285 = ssub.s32 %s18, 1
        %s286 = sand.u32 %s45, 1
        %s287 = scalar_lea.sflag [#allocation4], %s286
        %s288 = sand.u32 %s45, 1
        %s289 = smul.addr %s288, 512
        %s290 = scalar_lea.vmem [#allocation3], %s289
        // Predicated region
        $region45: #{tpu_custom_call.1} parent=43 // pred_check
          %p291 = pneg %p58
        $region46: #{tpu_custom_call.1} parent=43 // pred_check_branch
          %293 = sbr.rel (%p291) target = $region48
        $region47: #{tpu_custom_call.1} parent=43 // pred_region
          %294 = dma.done %s287, 8192
        $region48: #{tpu_custom_call.1} parent=43 // pred_fallthru
          _
        %s295 = sand.u32 %s45, 1
        %s296 = scalar_lea.sflag [#allocation4], %s295
        %s297 = sand.u32 %s45, 1
        %s298 = smul.addr %s297, 512
        %s299 = scalar_lea.vmem [#allocation3], %s298
        %p300 = pneg %p58
        %p301 = pneg %p55
        %p302 = scmp.lt.s32.totalorder %s27, 1
        %s303 = scalar_select %p302, %s27, 1
        %p304 = scmp.lt.s32.totalorder %s28, 0
        %s305 = scalar_select %p304, %s28, 0
        %s306 = sadd.s32 %s305, %s303
        %s307 = smul.addr %s306, 2
        %s308 = scalar_lea.vmem %s1, %s307
        %p309 = pneg %p86
        %p310 = pneg %p83
        %s311 = smul.u32 32, %s28
        %p312 = scmp.lt.s32.totalorder %s27, 1
        %s313 = scalar_select %p312, %s27, 1
        %p314 = scmp.lt.s32.totalorder %s311, 31
        %s315 = scalar_select %p314, %s311, 31
        %s316 = smul.addr %s313, 32
        %s317 = sadd.s32 %s315, %s316
        %s318 = smul.addr %s317, 8
        %s319 = scalar_lea.vmem %s2, %s318
        %p320 = pneg %p114
        %p321 = pneg %p111
        %p322 = pneg %p135
        %p323 = pneg %p132
        %p324 = pneg %p156
        %p325 = pneg %p153
        %p326 = pneg %p177
        %p327 = pneg %p174
        %p328 = pneg %p205
        %p329 = pneg %p202
        %s330 = sand.u32 %s192, 1
        %s331 = scalar_lea.sflag [#allocation5], %s330
        %s332 = sand.u32 %s192, 1
        %s333 = smul.addr %s332, 256
        %s334 = scalar_lea.vmem [#allocation6], %s333
        %s335 = smul.u32 4, %s28
        %p336 = scmp.lt.s32.totalorder %s27, 1
        %s337 = scalar_select %p336, %s27, 1
        %p338 = scmp.lt.s32.totalorder %s28, 0
        %s339 = scalar_select %p338, %s28, 0
        %s340 = sadd.s32 %s339, %s337
        %s341 = smul.addr %s340, 2
        %s342 = scalar_lea.vmem %s1, %s341
        %s343 = smul.u32 32, %s28
        %p344 = scmp.lt.s32.totalorder %s27, 1
        %s345 = scalar_select %p344, %s27, 1
        %p346 = scmp.lt.s32.totalorder %s343, 31
        %s347 = scalar_select %p346, %s343, 31
        %s348 = smul.addr %s345, 32
        %s349 = sadd.s32 %s347, %s348
        %s350 = smul.addr %s349, 8
        %s351 = scalar_lea.vmem %s2, %s350
        %s352 = smul.u32 32, %s28
        %s353 = smul.u32 2, %s28
        %v354 = vld [vmem:[%s290] sm:$0xff]
        %v355 = vld [vmem:[%s290 + $0x8] sm:$0xff]
        %v356 = vld [vmem:[%s290 + $0x10] sm:$0xff]
        %v357 = vld [vmem:[%s290 + $0x18] sm:$0xff]
        %v358 = vld [vmem:[%s290 + $0x20] sm:$0xff]
        %v359 = vld [vmem:[%s290 + $0x28] sm:$0xff]
        %v360 = vld [vmem:[%s290 + $0x30] sm:$0xff]
        %v361 = vld [vmem:[%s290 + $0x38] sm:$0xff]
        %v362 = vld [vmem:[%s290 + $0x40] sm:$0xff]
        %v363 = vld [vmem:[%s290 + $0x48] sm:$0xff]
        %v364 = vld [vmem:[%s290 + $0x50] sm:$0xff]
        %v365 = vld [vmem:[%s290 + $0x58] sm:$0xff]
        %v366 = vld [vmem:[%s290 + $0x60] sm:$0xff]
        %v367 = vld [vmem:[%s290 + $0x68] sm:$0xff]
        %v368 = vld [vmem:[%s290 + $0x70] sm:$0xff]
        %v369 = vld [vmem:[%s290 + $0x78] sm:$0xff]
        %v370 = vld [vmem:[%s290 + $0x80] sm:$0xff]
        %v371 = vld [vmem:[%s290 + $0x88] sm:$0xff]
        %v372 = vld [vmem:[%s290 + $0x90] sm:$0xff]
        %v373 = vld [vmem:[%s290 + $0x98] sm:$0xff]
        %v374 = vld [vmem:[%s290 + $0xa0] sm:$0xff]
        %v375 = vld [vmem:[%s290 + $0xa8] sm:$0xff]
        %v376 = vld [vmem:[%s290 + $0xb0] sm:$0xff]
        %v377 = vld [vmem:[%s290 + $0xb8] sm:$0xff]
        %v378 = vld [vmem:[%s290 + $0xc0] sm:$0xff]
        %v379 = vld [vmem:[%s290 + $0xc8] sm:$0xff]
        %v380 = vld [vmem:[%s290 + $0xd0] sm:$0xff]
        %v381 = vld [vmem:[%s290 + $0xd8] sm:$0xff]
        %v382 = vld [vmem:[%s290 + $0xe0] sm:$0xff]
        %v383 = vld [vmem:[%s290 + $0xe8] sm:$0xff]
        %v384 = vld [vmem:[%s290 + $0xf0] sm:$0xff]
        %v385 = vld [vmem:[%s290 + $0xf8] sm:$0xff]
        %v386 = vld [vmem:[%s290 + $0x100] sm:$0xff]
        %v387 = vld [vmem:[%s290 + $0x108] sm:$0xff]
        %v388 = vld [vmem:[%s290 + $0x110] sm:$0xff]
        %v389 = vld [vmem:[%s290 + $0x118] sm:$0xff]
        %v390 = vld [vmem:[%s290 + $0x120] sm:$0xff]
        %v391 = vld [vmem:[%s290 + $0x128] sm:$0xff]
        %v392 = vld [vmem:[%s290 + $0x130] sm:$0xff]
        %v393 = vld [vmem:[%s290 + $0x138] sm:$0xff]
        %v394 = vld [vmem:[%s290 + $0x140] sm:$0xff]
        %v395 = vld [vmem:[%s290 + $0x148] sm:$0xff]
        %v396 = vld [vmem:[%s290 + $0x150] sm:$0xff]
        %v397 = vld [vmem:[%s290 + $0x158] sm:$0xff]
        %v398 = vld [vmem:[%s290 + $0x160] sm:$0xff]
        %v399 = vld [vmem:[%s290 + $0x168] sm:$0xff]
        %v400 = vld [vmem:[%s290 + $0x170] sm:$0xff]
        %v401 = vld [vmem:[%s290 + $0x178] sm:$0xff]
        %v402 = vld [vmem:[%s290 + $0x180] sm:$0xff]
        %v403 = vld [vmem:[%s290 + $0x188] sm:$0xff]
        %v404 = vld [vmem:[%s290 + $0x190] sm:$0xff]
        %v405 = vld [vmem:[%s290 + $0x198] sm:$0xff]
        %v406 = vld [vmem:[%s290 + $0x1a0] sm:$0xff]
        %v407 = vld [vmem:[%s290 + $0x1a8] sm:$0xff]
        %v408 = vld [vmem:[%s290 + $0x1b0] sm:$0xff]
        %v409 = vld [vmem:[%s290 + $0x1b8] sm:$0xff]
        %v410 = vld [vmem:[%s290 + $0x1c0] sm:$0xff]
        %v411 = vld [vmem:[%s290 + $0x1c8] sm:$0xff]
        %v412 = vld [vmem:[%s290 + $0x1d0] sm:$0xff]
        %v413 = vld [vmem:[%s290 + $0x1d8] sm:$0xff]
        %v414 = vld [vmem:[%s290 + $0x1e0] sm:$0xff]
        %v415 = vld [vmem:[%s290 + $0x1e8] sm:$0xff]
        %v416 = vld [vmem:[%s290 + $0x1f0] sm:$0xff]
        %v417 = vld [vmem:[%s290 + $0x1f8] sm:$0xff]
        %418 = vxpose.xlu0.b32.start [1/16] %v354, 128
        %419 = vxpose.xlu0.b32.cont [2/16] %v358, 128
        %420 = vxpose.xlu0.b32.cont [3/16] %v362, 128
        %421 = vxpose.xlu0.b32.cont [4/16] %v366, 128
        %422 = vxpose.xlu0.b32.cont [5/16] %v370, 128
        %423 = vxpose.xlu0.b32.cont [6/16] %v374, 128
        %424 = vxpose.xlu0.b32.cont [7/16] %v378, 128
        %425 = vxpose.xlu0.b32.cont [8/16] %v382, 128
        %426 = vxpose.xlu0.b32.cont [9/16] %v386, 128
        %427 = vxpose.xlu0.b32.cont [10/16] %v390, 128
        %428 = vxpose.xlu0.b32.cont [11/16] %v394, 128
        %429 = vxpose.xlu0.b32.cont [12/16] %v398, 128
        %430 = vxpose.xlu0.b32.cont [13/16] %v402, 128
        %431 = vxpose.xlu0.b32.cont [14/16] %v406, 128
        %432 = vxpose.xlu0.b32.cont [15/16] %v410, 128
        %433 = vxpose.xlu0.b32.end [16/16] %v414, 128
        %v434 = vpop.trf.xlu0
        %v435 = vpop.trf.xlu0
        %v436 = vpop.trf.xlu0
        %v437 = vpop.trf.xlu0
        %v438 = vpop.trf.xlu0
        %v439 = vpop.trf.xlu0
        %v440 = vpop.trf.xlu0
        %v441 = vpop.trf.xlu0
        %v442 = vpop.trf.xlu0
        %v443 = vpop.trf.xlu0
        %v444 = vpop.trf.xlu0
        %v445 = vpop.trf.xlu0
        %v446 = vpop.trf.xlu0
        %v447 = vpop.trf.xlu0
        %v448 = vpop.trf.xlu0
        %v449 = vpop.trf.xlu0
        %450 = vxpose.xlu0.b32.start [1/16] %v355, 128
        %451 = vxpose.xlu0.b32.cont [2/16] %v359, 128
        %452 = vxpose.xlu0.b32.cont [3/16] %v363, 128
        %453 = vxpose.xlu0.b32.cont [4/16] %v367, 128
        %454 = vxpose.xlu0.b32.cont [5/16] %v371, 128
        %455 = vxpose.xlu0.b32.cont [6/16] %v375, 128
        %456 = vxpose.xlu0.b32.cont [7/16] %v379, 128
        %457 = vxpose.xlu0.b32.cont [8/16] %v383, 128
        %458 = vxpose.xlu0.b32.cont [9/16] %v387, 128
        %459 = vxpose.xlu0.b32.cont [10/16] %v391, 128
        %460 = vxpose.xlu0.b32.cont [11/16] %v395, 128
        %461 = vxpose.xlu0.b32.cont [12/16] %v399, 128
        %462 = vxpose.xlu0.b32.cont [13/16] %v403, 128
        %463 = vxpose.xlu0.b32.cont [14/16] %v407, 128
        %464 = vxpose.xlu0.b32.cont [15/16] %v411, 128
        %465 = vxpose.xlu0.b32.end [16/16] %v415, 128
        %v466 = vpop.trf.xlu0
        %v467 = vpop.trf.xlu0
        %v468 = vpop.trf.xlu0
        %v469 = vpop.trf.xlu0
        %v470 = vpop.trf.xlu0
        %v471 = vpop.trf.xlu0
        %v472 = vpop.trf.xlu0
        %v473 = vpop.trf.xlu0
        %v474 = vpop.trf.xlu0
        %v475 = vpop.trf.xlu0
        %v476 = vpop.trf.xlu0
        %v477 = vpop.trf.xlu0
        %v478 = vpop.trf.xlu0
        %v479 = vpop.trf.xlu0
        %v480 = vpop.trf.xlu0
        %v481 = vpop.trf.xlu0
        %482 = vxpose.xlu0.b32.start [1/16] %v356, 128
        %483 = vxpose.xlu0.b32.cont [2/16] %v360, 128
        %484 = vxpose.xlu0.b32.cont [3/16] %v364, 128
        %485 = vxpose.xlu0.b32.cont [4/16] %v368, 128
        %486 = vxpose.xlu0.b32.cont [5/16] %v372, 128
        %487 = vxpose.xlu0.b32.cont [6/16] %v376, 128
        %488 = vxpose.xlu0.b32.cont [7/16] %v380, 128
        %489 = vxpose.xlu0.b32.cont [8/16] %v384, 128
        %490 = vxpose.xlu0.b32.cont [9/16] %v388, 128
        %491 = vxpose.xlu0.b32.cont [10/16] %v392, 128
        %492 = vxpose.xlu0.b32.cont [11/16] %v396, 128
        %493 = vxpose.xlu0.b32.cont [12/16] %v400, 128
        %494 = vxpose.xlu0.b32.cont [13/16] %v404, 128
        %495 = vxpose.xlu0.b32.cont [14/16] %v408, 128
        %496 = vxpose.xlu0.b32.cont [15/16] %v412, 128
        %497 = vxpose.xlu0.b32.end [16/16] %v416, 128
        %v498 = vpop.trf.xlu0
        %v499 = vpop.trf.xlu0
        %v500 = vpop.trf.xlu0
        %v501 = vpop.trf.xlu0
        %v502 = vpop.trf.xlu0
        %v503 = vpop.trf.xlu0
        %v504 = vpop.trf.xlu0
        %v505 = vpop.trf.xlu0
        %v506 = vpop.trf.xlu0
        %v507 = vpop.trf.xlu0
        %v508 = vpop.trf.xlu0
        %v509 = vpop.trf.xlu0
        %v510 = vpop.trf.xlu0
        %v511 = vpop.trf.xlu0
        %v512 = vpop.trf.xlu0
        %v513 = vpop.trf.xlu0
        %514 = vxpose.xlu0.b32.start [1/16] %v357, 128
        %515 = vxpose.xlu0.b32.cont [2/16] %v361, 128
        %516 = vxpose.xlu0.b32.cont [3/16] %v365, 128
        %517 = vxpose.xlu0.b32.cont [4/16] %v369, 128
        %518 = vxpose.xlu0.b32.cont [5/16] %v373, 128
        %519 = vxpose.xlu0.b32.cont [6/16] %v377, 128
        %520 = vxpose.xlu0.b32.cont [7/16] %v381, 128
        %521 = vxpose.xlu0.b32.cont [8/16] %v385, 128
        %522 = vxpose.xlu0.b32.cont [9/16] %v389, 128
        %523 = vxpose.xlu0.b32.cont [10/16] %v393, 128
        %524 = vxpose.xlu0.b32.cont [11/16] %v397, 128
        %525 = vxpose.xlu0.b32.cont [12/16] %v401, 128
        %526 = vxpose.xlu0.b32.cont [13/16] %v405, 128
        %527 = vxpose.xlu0.b32.cont [14/16] %v409, 128
        %528 = vxpose.xlu0.b32.cont [15/16] %v413, 128
        %529 = vxpose.xlu0.b32.end [16/16] %v417, 128
        %v530 = vpop.trf.xlu0
        %v531 = vpop.trf.xlu0
        %v532 = vpop.trf.xlu0
        %v533 = vpop.trf.xlu0
        %v534 = vpop.trf.xlu0
        %v535 = vpop.trf.xlu0
        %v536 = vpop.trf.xlu0
        %v537 = vpop.trf.xlu0
        %v538 = vpop.trf.xlu0
        %v539 = vpop.trf.xlu0
        %v540 = vpop.trf.xlu0
        %v541 = vpop.trf.xlu0
        %v542 = vpop.trf.xlu0
        %v543 = vpop.trf.xlu0
        %v544 = vpop.trf.xlu0
        %v545 = vpop.trf.xlu0
        %v546 = vld [vmem:[%s342] sm:$0x3]
        %547 = vst [vmem:[#allocation2 + $0x7] sm:$0x1] %v546
        %548 = vst [vmem:[#allocation2 + $0x8] sm:$0xff] %v434
        %549 = vst [vmem:[#allocation2 + $0x10] sm:$0xff] %v435
        %550 = vst [vmem:[#allocation2 + $0x18] sm:$0xff] %v436
        %551 = vst [vmem:[#allocation2 + $0x20] sm:$0xff] %v437
        %552 = vst [vmem:[#allocation2 + $0x28] sm:$0xff] %v438
        %553 = vst [vmem:[#allocation2 + $0x30] sm:$0xff] %v439
        %554 = vst [vmem:[#allocation2 + $0x38] sm:$0xff] %v440
        %555 = vst [vmem:[#allocation2 + $0x40] sm:$0xff] %v441
        %556 = vst [vmem:[#allocation2 + $0x48] sm:$0xff] %v442
        %557 = vst [vmem:[#allocation2 + $0x50] sm:$0xff] %v443
        %558 = vst [vmem:[#allocation2 + $0x58] sm:$0xff] %v444
        %559 = vst [vmem:[#allocation2 + $0x60] sm:$0xff] %v445
        %560 = vst [vmem:[#allocation2 + $0x68] sm:$0xff] %v446
        %561 = vst [vmem:[#allocation2 + $0x70] sm:$0xff] %v447
        %562 = vst [vmem:[#allocation2 + $0x78] sm:$0xff] %v448
        %563 = vst [vmem:[#allocation2 + $0x80] sm:$0xff] %v449
        %564 = vst [vmem:[#allocation2 + $0x88] sm:$0xff] %v466
        %565 = vst [vmem:[#allocation2 + $0x90] sm:$0xff] %v467
        %566 = vst [vmem:[#allocation2 + $0x98] sm:$0xff] %v468
        %567 = vst [vmem:[#allocation2 + $0xa0] sm:$0xff] %v469
        %568 = vst [vmem:[#allocation2 + $0xa8] sm:$0xff] %v470
        %569 = vst [vmem:[#allocation2 + $0xb0] sm:$0xff] %v471
        %570 = vst [vmem:[#allocation2 + $0xb8] sm:$0xff] %v472
        %571 = vst [vmem:[#allocation2 + $0xc0] sm:$0xff] %v473
        %572 = vst [vmem:[#allocation2 + $0xc8] sm:$0xff] %v474
        %573 = vst [vmem:[#allocation2 + $0xd0] sm:$0xff] %v475
        %574 = vst [vmem:[#allocation2 + $0xd8] sm:$0xff] %v476
        %575 = vst [vmem:[#allocation2 + $0xe0] sm:$0xff] %v477
        %576 = vst [vmem:[#allocation2 + $0xe8] sm:$0xff] %v478
        %577 = vst [vmem:[#allocation2 + $0xf0] sm:$0xff] %v479
        %578 = vst [vmem:[#allocation2 + $0xf8] sm:$0xff] %v480
        %579 = vst [vmem:[#allocation2 + $0x100] sm:$0xff] %v481
        %580 = vst [vmem:[#allocation2 + $0x108] sm:$0xff] %v498
        %581 = vst [vmem:[#allocation2 + $0x110] sm:$0xff] %v499
        %582 = vst [vmem:[#allocation2 + $0x118] sm:$0xff] %v500
        %583 = vst [vmem:[#allocation2 + $0x120] sm:$0xff] %v501
        %584 = vst [vmem:[#allocation2 + $0x128] sm:$0xff] %v502
        %585 = vst [vmem:[#allocation2 + $0x130] sm:$0xff] %v503
        %586 = vst [vmem:[#allocation2 + $0x138] sm:$0xff] %v504
        %587 = vst [vmem:[#allocation2 + $0x140] sm:$0xff] %v505
        %588 = vst [vmem:[#allocation2 + $0x148] sm:$0xff] %v506
        %589 = vst [vmem:[#allocation2 + $0x150] sm:$0xff] %v507
        %590 = vst [vmem:[#allocation2 + $0x158] sm:$0xff] %v508
        %591 = vst [vmem:[#allocation2 + $0x160] sm:$0xff] %v509
        %592 = vst [vmem:[#allocation2 + $0x168] sm:$0xff] %v510
        %593 = vst [vmem:[#allocation2 + $0x170] sm:$0xff] %v511
        %594 = vst [vmem:[#allocation2 + $0x178] sm:$0xff] %v512
        %595 = vst [vmem:[#allocation2 + $0x180] sm:$0xff] %v513
        %596 = vst [vmem:[#allocation2 + $0x188] sm:$0xff] %v530
        %597 = vst [vmem:[#allocation2 + $0x190] sm:$0xff] %v531
        %598 = vst [vmem:[#allocation2 + $0x198] sm:$0xff] %v532
        %599 = vst [vmem:[#allocation2 + $0x1a0] sm:$0xff] %v533
        %600 = vst [vmem:[#allocation2 + $0x1a8] sm:$0xff] %v534
        %601 = vst [vmem:[#allocation2 + $0x1b0] sm:$0xff] %v535
        %602 = vst [vmem:[#allocation2 + $0x1b8] sm:$0xff] %v536
        %603 = vst [vmem:[#allocation2 + $0x1c0] sm:$0xff] %v537
        %604 = vst [vmem:[#allocation2 + $0x1c8] sm:$0xff] %v538
        %605 = vst [vmem:[#allocation2 + $0x1d0] sm:$0xff] %v539
        %606 = vst [vmem:[#allocation2 + $0x1d8] sm:$0xff] %v540
        %607 = vst [vmem:[#allocation2 + $0x1e0] sm:$0xff] %v541
        %608 = vst [vmem:[#allocation2 + $0x1e8] sm:$0xff] %v542
        %609 = vst [vmem:[#allocation2 + $0x1f0] sm:$0xff] %v543
        %610 = vst [vmem:[#allocation2 + $0x1f8] sm:$0xff] %v544
        %611 = vst [vmem:[#allocation2 + $0x200] sm:$0xff] %v545
        %612 = vst [vmem:[#allocation2 + $0x207] sm:$0x2] %v546
        %v613 = vld [vmem:[%s3] sm:$0x7]
        %s614 = scalar_lea.vmem [#allocation2], 7
        %v615 = vld [vmem:[%s614] ss:$2 sm:$0xff]
        %s616 = scalar_lea.vmem [#allocation2], 23
        %v617 = vld [vmem:[%s616] ss:$2 sm:$0xff]
        %s618 = scalar_lea.vmem [#allocation2], 39
        %v619 = vld [vmem:[%s618] ss:$2 sm:$0xff]
        %s620 = scalar_lea.vmem [#allocation2], 55
        %v621 = vld [vmem:[%s620] ss:$2 sm:$0xff]
        %s622 = scalar_lea.vmem [#allocation2], 71
        %v623 = vld [vmem:[%s622] ss:$2 sm:$0xff]
        %s624 = scalar_lea.vmem [#allocation2], 87
        %v625 = vld [vmem:[%s624] ss:$2 sm:$0xff]
        %s626 = scalar_lea.vmem [#allocation2], 103
        %v627 = vld [vmem:[%s626] ss:$2 sm:$0xff]
        %s628 = scalar_lea.vmem [#allocation2], 119
        %v629 = vld [vmem:[%s628] ss:$2 sm:$0xff]
        %s630 = scalar_lea.vmem [#allocation2], 135
        %v631 = vld [vmem:[%s630] ss:$2 sm:$0xff]
        %s632 = scalar_lea.vmem [#allocation2], 151
        %v633 = vld [vmem:[%s632] ss:$2 sm:$0xff]
        %s634 = scalar_lea.vmem [#allocation2], 167
        %v635 = vld [vmem:[%s634] ss:$2 sm:$0xff]
        %s636 = scalar_lea.vmem [#allocation2], 183
        %v637 = vld [vmem:[%s636] ss:$2 sm:$0xff]
        %s638 = scalar_lea.vmem [#allocation2], 199
        %v639 = vld [vmem:[%s638] ss:$2 sm:$0xff]
        %s640 = scalar_lea.vmem [#allocation2], 215
        %v641 = vld [vmem:[%s640] ss:$2 sm:$0xff]
        %s642 = scalar_lea.vmem [#allocation2], 231
        %v643 = vld [vmem:[%s642] ss:$2 sm:$0xff]
        %s644 = scalar_lea.vmem [#allocation2], 247
        %v645 = vld [vmem:[%s644] ss:$2 sm:$0xff]
        %s646 = scalar_lea.vmem [#allocation2], 263
        %v647 = vld [vmem:[%s646] ss:$2 sm:$0xff]
        %s648 = scalar_lea.vmem [#allocation2], 279
        %v649 = vld [vmem:[%s648] ss:$2 sm:$0xff]
        %s650 = scalar_lea.vmem [#allocation2], 295
        %v651 = vld [vmem:[%s650] ss:$2 sm:$0xff]
        %s652 = scalar_lea.vmem [#allocation2], 311
        %v653 = vld [vmem:[%s652] ss:$2 sm:$0xff]
        %s654 = scalar_lea.vmem [#allocation2], 327
        %v655 = vld [vmem:[%s654] ss:$2 sm:$0xff]
        %s656 = scalar_lea.vmem [#allocation2], 343
        %v657 = vld [vmem:[%s656] ss:$2 sm:$0xff]
        %s658 = scalar_lea.vmem [#allocation2], 359
        %v659 = vld [vmem:[%s658] ss:$2 sm:$0xff]
        %s660 = scalar_lea.vmem [#allocation2], 375
        %v661 = vld [vmem:[%s660] ss:$2 sm:$0xff]
        %s662 = scalar_lea.vmem [#allocation2], 391
        %v663 = vld [vmem:[%s662] ss:$2 sm:$0xff]
        %s664 = scalar_lea.vmem [#allocation2], 407
        %v665 = vld [vmem:[%s664] ss:$2 sm:$0xff]
        %s666 = scalar_lea.vmem [#allocation2], 423
        %v667 = vld [vmem:[%s666] ss:$2 sm:$0xff]
        %s668 = scalar_lea.vmem [#allocation2], 439
        %v669 = vld [vmem:[%s668] ss:$2 sm:$0xff]
        %s670 = scalar_lea.vmem [#allocation2], 455
        %v671 = vld [vmem:[%s670] ss:$2 sm:$0xff]
        %s672 = scalar_lea.vmem [#allocation2], 471
        %v673 = vld [vmem:[%s672] ss:$2 sm:$0xff]
        %s674 = scalar_lea.vmem [#allocation2], 487
        %v675 = vld [vmem:[%s674] ss:$2 sm:$0xff]
        %s676 = scalar_lea.vmem [#allocation2], 503
        %v677 = vld [vmem:[%s676] ss:$2 sm:$0xff]
        %v678 = vlaneseq
        %v679 = vshrl.u32 %v678, 7
        %v680 = vsub.s32 0, %v679
        %v681 = vrot.slane %v613, %v680
        %v682 = vmul.f32 %v615, %v681
        %v683 = vmul.f32 %v617, %v681
        %v684 = vmul.f32 %v619, %v681
        %v685 = vmul.f32 %v621, %v681
        %v686 = vmul.f32 %v623, %v681
        %v687 = vmul.f32 %v625, %v681
        %v688 = vmul.f32 %v627, %v681
        %v689 = vmul.f32 %v629, %v681
        %v690 = vmul.f32 %v631, %v681
        %v691 = vmul.f32 %v633, %v681
        %v692 = vmul.f32 %v635, %v681
        %v693 = vmul.f32 %v637, %v681
        %v694 = vmul.f32 %v639, %v681
        %v695 = vmul.f32 %v641, %v681
        %v696 = vmul.f32 %v643, %v681
        %v697 = vmul.f32 %v645, %v681
        %v698 = vmul.f32 %v647, %v681
        %v699 = vmul.f32 %v649, %v681
        %v700 = vmul.f32 %v651, %v681
        %v701 = vmul.f32 %v653, %v681
        %v702 = vmul.f32 %v655, %v681
        %v703 = vmul.f32 %v657, %v681
        %v704 = vmul.f32 %v659, %v681
        %v705 = vmul.f32 %v661, %v681
        %v706 = vmul.f32 %v663, %v681
        %v707 = vmul.f32 %v665, %v681
        %v708 = vmul.f32 %v667, %v681
        %v709 = vmul.f32 %v669, %v681
        %v710 = vmul.f32 %v671, %v681
        %v711 = vmul.f32 %v673, %v681
        %v712 = vmul.f32 %v675, %v681
        %v713 = vmul.f32 %v677, %v681
        %s714 = scalar_lea.vmem [#allocation2], 8
        %v715 = vld [vmem:[%s714] ss:$2 sm:$0xff]
        %s716 = scalar_lea.vmem [#allocation2], 24
        %v717 = vld [vmem:[%s716] ss:$2 sm:$0xff]
        %s718 = scalar_lea.vmem [#allocation2], 40
        %v719 = vld [vmem:[%s718] ss:$2 sm:$0xff]
        %s720 = scalar_lea.vmem [#allocation2], 56
        %v721 = vld [vmem:[%s720] ss:$2 sm:$0xff]
        %s722 = scalar_lea.vmem [#allocation2], 72
        %v723 = vld [vmem:[%s722] ss:$2 sm:$0xff]
        %s724 = scalar_lea.vmem [#allocation2], 88
        %v725 = vld [vmem:[%s724] ss:$2 sm:$0xff]
        %s726 = scalar_lea.vmem [#allocation2], 104
        %v727 = vld [vmem:[%s726] ss:$2 sm:$0xff]
        %s728 = scalar_lea.vmem [#allocation2], 120
        %v729 = vld [vmem:[%s728] ss:$2 sm:$0xff]
        %s730 = scalar_lea.vmem [#allocation2], 136
        %v731 = vld [vmem:[%s730] ss:$2 sm:$0xff]
        %s732 = scalar_lea.vmem [#allocation2], 152
        %v733 = vld [vmem:[%s732] ss:$2 sm:$0xff]
        %s734 = scalar_lea.vmem [#allocation2], 168
        %v735 = vld [vmem:[%s734] ss:$2 sm:$0xff]
        %s736 = scalar_lea.vmem [#allocation2], 184
        %v737 = vld [vmem:[%s736] ss:$2 sm:$0xff]
        %s738 = scalar_lea.vmem [#allocation2], 200
        %v739 = vld [vmem:[%s738] ss:$2 sm:$0xff]
        %s740 = scalar_lea.vmem [#allocation2], 216
        %v741 = vld [vmem:[%s740] ss:$2 sm:$0xff]
        %s742 = scalar_lea.vmem [#allocation2], 232
        %v743 = vld [vmem:[%s742] ss:$2 sm:$0xff]
        %s744 = scalar_lea.vmem [#allocation2], 248
        %v745 = vld [vmem:[%s744] ss:$2 sm:$0xff]
        %s746 = scalar_lea.vmem [#allocation2], 264
        %v747 = vld [vmem:[%s746] ss:$2 sm:$0xff]
        %s748 = scalar_lea.vmem [#allocation2], 280
        %v749 = vld [vmem:[%s748] ss:$2 sm:$0xff]
        %s750 = scalar_lea.vmem [#allocation2], 296
        %v751 = vld [vmem:[%s750] ss:$2 sm:$0xff]
        %s752 = scalar_lea.vmem [#allocation2], 312
        %v753 = vld [vmem:[%s752] ss:$2 sm:$0xff]
        %s754 = scalar_lea.vmem [#allocation2], 328
        %v755 = vld [vmem:[%s754] ss:$2 sm:$0xff]
        %s756 = scalar_lea.vmem [#allocation2], 344
        %v757 = vld [vmem:[%s756] ss:$2 sm:$0xff]
        %s758 = scalar_lea.vmem [#allocation2], 360
        %v759 = vld [vmem:[%s758] ss:$2 sm:$0xff]
        %s760 = scalar_lea.vmem [#allocation2], 376
        %v761 = vld [vmem:[%s760] ss:$2 sm:$0xff]
        %s762 = scalar_lea.vmem [#allocation2], 392
        %v763 = vld [vmem:[%s762] ss:$2 sm:$0xff]
        %s764 = scalar_lea.vmem [#allocation2], 408
        %v765 = vld [vmem:[%s764] ss:$2 sm:$0xff]
        %s766 = scalar_lea.vmem [#allocation2], 424
        %v767 = vld [vmem:[%s766] ss:$2 sm:$0xff]
        %s768 = scalar_lea.vmem [#allocation2], 440
        %v769 = vld [vmem:[%s768] ss:$2 sm:$0xff]
        %s770 = scalar_lea.vmem [#allocation2], 456
        %v771 = vld [vmem:[%s770] ss:$2 sm:$0xff]
        %s772 = scalar_lea.vmem [#allocation2], 472
        %v773 = vld [vmem:[%s772] ss:$2 sm:$0xff]
        %s774 = scalar_lea.vmem [#allocation2], 488
        %v775 = vld [vmem:[%s774] ss:$2 sm:$0xff]
        %s776 = scalar_lea.vmem [#allocation2], 504
        %v777 = vld [vmem:[%s776] ss:$2 sm:$0xff]
        %v778 = vlaneseq
        %v779 = vshrl.u32 %v778, 7
        %v780 = vsub.s32 1, %v779
        %v781 = vrot.slane %v613, %v780
        %v782 = vmul.f32 %v715, %v781
        %v783 = vmul.f32 %v717, %v781
        %v784 = vmul.f32 %v719, %v781
        %v785 = vmul.f32 %v721, %v781
        %v786 = vmul.f32 %v723, %v781
        %v787 = vmul.f32 %v725, %v781
        %v788 = vmul.f32 %v727, %v781
        %v789 = vmul.f32 %v729, %v781
        %v790 = vmul.f32 %v731, %v781
        %v791 = vmul.f32 %v733, %v781
        %v792 = vmul.f32 %v735, %v781
        %v793 = vmul.f32 %v737, %v781
        %v794 = vmul.f32 %v739, %v781
        %v795 = vmul.f32 %v741, %v781
        %v796 = vmul.f32 %v743, %v781
        %v797 = vmul.f32 %v745, %v781
        %v798 = vmul.f32 %v747, %v781
        %v799 = vmul.f32 %v749, %v781
        %v800 = vmul.f32 %v751, %v781
        %v801 = vmul.f32 %v753, %v781
        %v802 = vmul.f32 %v755, %v781
        %v803 = vmul.f32 %v757, %v781
        %v804 = vmul.f32 %v759, %v781
        %v805 = vmul.f32 %v761, %v781
        %v806 = vmul.f32 %v763, %v781
        %v807 = vmul.f32 %v765, %v781
        %v808 = vmul.f32 %v767, %v781
        %v809 = vmul.f32 %v769, %v781
        %v810 = vmul.f32 %v771, %v781
        %v811 = vmul.f32 %v773, %v781
        %v812 = vmul.f32 %v775, %v781
        %v813 = vmul.f32 %v777, %v781
        %v814 = vadd.f32 %v682, %v782
        %v815 = vadd.f32 %v683, %v783
        %v816 = vadd.f32 %v684, %v784
        %v817 = vadd.f32 %v685, %v785
        %v818 = vadd.f32 %v686, %v786
        %v819 = vadd.f32 %v687, %v787
        %v820 = vadd.f32 %v688, %v788
        %v821 = vadd.f32 %v689, %v789
        %v822 = vadd.f32 %v690, %v790
        %v823 = vadd.f32 %v691, %v791
        %v824 = vadd.f32 %v692, %v792
        %v825 = vadd.f32 %v693, %v793
        %v826 = vadd.f32 %v694, %v794
        %v827 = vadd.f32 %v695, %v795
        %v828 = vadd.f32 %v696, %v796
        %v829 = vadd.f32 %v697, %v797
        %v830 = vadd.f32 %v698, %v798
        %v831 = vadd.f32 %v699, %v799
        %v832 = vadd.f32 %v700, %v800
        %v833 = vadd.f32 %v701, %v801
        %v834 = vadd.f32 %v702, %v802
        %v835 = vadd.f32 %v703, %v803
        %v836 = vadd.f32 %v704, %v804
        %v837 = vadd.f32 %v705, %v805
        %v838 = vadd.f32 %v706, %v806
        %v839 = vadd.f32 %v707, %v807
        %v840 = vadd.f32 %v708, %v808
        %v841 = vadd.f32 %v709, %v809
        %v842 = vadd.f32 %v710, %v810
        %v843 = vadd.f32 %v711, %v811
        %v844 = vadd.f32 %v712, %v812
        %v845 = vadd.f32 %v713, %v813
        %s846 = scalar_lea.vmem [#allocation2], 9
        %v847 = vld [vmem:[%s846] ss:$2 sm:$0xff]
        %s848 = scalar_lea.vmem [#allocation2], 25
        %v849 = vld [vmem:[%s848] ss:$2 sm:$0xff]
        %s850 = scalar_lea.vmem [#allocation2], 41
        %v851 = vld [vmem:[%s850] ss:$2 sm:$0xff]
        %s852 = scalar_lea.vmem [#allocation2], 57
        %v853 = vld [vmem:[%s852] ss:$2 sm:$0xff]
        %s854 = scalar_lea.vmem [#allocation2], 73
        %v855 = vld [vmem:[%s854] ss:$2 sm:$0xff]
        %s856 = scalar_lea.vmem [#allocation2], 89
        %v857 = vld [vmem:[%s856] ss:$2 sm:$0xff]
        %s858 = scalar_lea.vmem [#allocation2], 105
        %v859 = vld [vmem:[%s858] ss:$2 sm:$0xff]
        %s860 = scalar_lea.vmem [#allocation2], 121
        %v861 = vld [vmem:[%s860] ss:$2 sm:$0xff]
        %s862 = scalar_lea.vmem [#allocation2], 137
        %v863 = vld [vmem:[%s862] ss:$2 sm:$0xff]
        %s864 = scalar_lea.vmem [#allocation2], 153
        %v865 = vld [vmem:[%s864] ss:$2 sm:$0xff]
        %s866 = scalar_lea.vmem [#allocation2], 169
        %v867 = vld [vmem:[%s866] ss:$2 sm:$0xff]
        %s868 = scalar_lea.vmem [#allocation2], 185
        %v869 = vld [vmem:[%s868] ss:$2 sm:$0xff]
        %s870 = scalar_lea.vmem [#allocation2], 201
        %v871 = vld [vmem:[%s870] ss:$2 sm:$0xff]
        %s872 = scalar_lea.vmem [#allocation2], 217
        %v873 = vld [vmem:[%s872] ss:$2 sm:$0xff]
        %s874 = scalar_lea.vmem [#allocation2], 233
        %v875 = vld [vmem:[%s874] ss:$2 sm:$0xff]
        %s876 = scalar_lea.vmem [#allocation2], 249
        %v877 = vld [vmem:[%s876] ss:$2 sm:$0xff]
        %s878 = scalar_lea.vmem [#allocation2], 265
        %v879 = vld [vmem:[%s878] ss:$2 sm:$0xff]
        %s880 = scalar_lea.vmem [#allocation2], 281
        %v881 = vld [vmem:[%s880] ss:$2 sm:$0xff]
        %s882 = scalar_lea.vmem [#allocation2], 297
        %v883 = vld [vmem:[%s882] ss:$2 sm:$0xff]
        %s884 = scalar_lea.vmem [#allocation2], 313
        %v885 = vld [vmem:[%s884] ss:$2 sm:$0xff]
        %s886 = scalar_lea.vmem [#allocation2], 329
        %v887 = vld [vmem:[%s886] ss:$2 sm:$0xff]
        %s888 = scalar_lea.vmem [#allocation2], 345
        %v889 = vld [vmem:[%s888] ss:$2 sm:$0xff]
        %s890 = scalar_lea.vmem [#allocation2], 361
        %v891 = vld [vmem:[%s890] ss:$2 sm:$0xff]
        %s892 = scalar_lea.vmem [#allocation2], 377
        %v893 = vld [vmem:[%s892] ss:$2 sm:$0xff]
        %s894 = scalar_lea.vmem [#allocation2], 393
        %v895 = vld [vmem:[%s894] ss:$2 sm:$0xff]
        %s896 = scalar_lea.vmem [#allocation2], 409
        %v897 = vld [vmem:[%s896] ss:$2 sm:$0xff]
        %s898 = scalar_lea.vmem [#allocation2], 425
        %v899 = vld [vmem:[%s898] ss:$2 sm:$0xff]
        %s900 = scalar_lea.vmem [#allocation2], 441
        %v901 = vld [vmem:[%s900] ss:$2 sm:$0xff]
        %s902 = scalar_lea.vmem [#allocation2], 457
        %v903 = vld [vmem:[%s902] ss:$2 sm:$0xff]
        %s904 = scalar_lea.vmem [#allocation2], 473
        %v905 = vld [vmem:[%s904] ss:$2 sm:$0xff]
        %s906 = scalar_lea.vmem [#allocation2], 489
        %v907 = vld [vmem:[%s906] ss:$2 sm:$0xff]
        %s908 = scalar_lea.vmem [#allocation2], 505
        %v909 = vld [vmem:[%s908] ss:$2 sm:$0xff]
        %v910 = vlaneseq
        %v911 = vshrl.u32 %v910, 7
        %v912 = vsub.s32 2, %v911
        %v913 = vrot.slane %v613, %v912
        %v914 = vmul.f32 %v847, %v913
        %v915 = vmul.f32 %v849, %v913
        %v916 = vmul.f32 %v851, %v913
        %v917 = vmul.f32 %v853, %v913
        %v918 = vmul.f32 %v855, %v913
        %v919 = vmul.f32 %v857, %v913
        %v920 = vmul.f32 %v859, %v913
        %v921 = vmul.f32 %v861, %v913
        %v922 = vmul.f32 %v863, %v913
        %v923 = vmul.f32 %v865, %v913
        %v924 = vmul.f32 %v867, %v913
        %v925 = vmul.f32 %v869, %v913
        %v926 = vmul.f32 %v871, %v913
        %v927 = vmul.f32 %v873, %v913
        %v928 = vmul.f32 %v875, %v913
        %v929 = vmul.f32 %v877, %v913
        %v930 = vmul.f32 %v879, %v913
        %v931 = vmul.f32 %v881, %v913
        %v932 = vmul.f32 %v883, %v913
        %v933 = vmul.f32 %v885, %v913
        %v934 = vmul.f32 %v887, %v913
        %v935 = vmul.f32 %v889, %v913
        %v936 = vmul.f32 %v891, %v913
        %v937 = vmul.f32 %v893, %v913
        %v938 = vmul.f32 %v895, %v913
        %v939 = vmul.f32 %v897, %v913
        %v940 = vmul.f32 %v899, %v913
        %v941 = vmul.f32 %v901, %v913
        %v942 = vmul.f32 %v903, %v913
        %v943 = vmul.f32 %v905, %v913
        %v944 = vmul.f32 %v907, %v913
        %v945 = vmul.f32 %v909, %v913
        %v946 = vadd.f32 %v814, %v914
        %v947 = vadd.f32 %v815, %v915
        %v948 = vadd.f32 %v816, %v916
        %v949 = vadd.f32 %v817, %v917
        %v950 = vadd.f32 %v818, %v918
        %v951 = vadd.f32 %v819, %v919
        %v952 = vadd.f32 %v820, %v920
        %v953 = vadd.f32 %v821, %v921
        %v954 = vadd.f32 %v822, %v922
        %v955 = vadd.f32 %v823, %v923
        %v956 = vadd.f32 %v824, %v924
        %v957 = vadd.f32 %v825, %v925
        %v958 = vadd.f32 %v826, %v926
        %v959 = vadd.f32 %v827, %v927
        %v960 = vadd.f32 %v828, %v928
        %v961 = vadd.f32 %v829, %v929
        %v962 = vadd.f32 %v830, %v930
        %v963 = vadd.f32 %v831, %v931
        %v964 = vadd.f32 %v832, %v932
        %v965 = vadd.f32 %v833, %v933
        %v966 = vadd.f32 %v834, %v934
        %v967 = vadd.f32 %v835, %v935
        %v968 = vadd.f32 %v836, %v936
        %v969 = vadd.f32 %v837, %v937
        %v970 = vadd.f32 %v838, %v938
        %v971 = vadd.f32 %v839, %v939
        %v972 = vadd.f32 %v840, %v940
        %v973 = vadd.f32 %v841, %v941
        %v974 = vadd.f32 %v842, %v942
        %v975 = vadd.f32 %v843, %v943
        %v976 = vadd.f32 %v844, %v944
        %v977 = vadd.f32 %v845, %v945
        %v978 = vld [vmem:[%s351] sm:$0xff]
        %v979 = vld [vmem:[%s351 + $0x8] sm:$0xff]
        %v980 = vld [vmem:[%s351 + $0x10] sm:$0xff]
        %v981 = vld [vmem:[%s351 + $0x18] sm:$0xff]
        %v982 = vld [vmem:[%s351 + $0x20] sm:$0xff]
        %v983 = vld [vmem:[%s351 + $0x28] sm:$0xff]
        %v984 = vld [vmem:[%s351 + $0x30] sm:$0xff]
        %v985 = vld [vmem:[%s351 + $0x38] sm:$0xff]
        %v986 = vld [vmem:[%s351 + $0x40] sm:$0xff]
        %v987 = vld [vmem:[%s351 + $0x48] sm:$0xff]
        %v988 = vld [vmem:[%s351 + $0x50] sm:$0xff]
        %v989 = vld [vmem:[%s351 + $0x58] sm:$0xff]
        %v990 = vld [vmem:[%s351 + $0x60] sm:$0xff]
        %v991 = vld [vmem:[%s351 + $0x68] sm:$0xff]
        %v992 = vld [vmem:[%s351 + $0x70] sm:$0xff]
        %v993 = vld [vmem:[%s351 + $0x78] sm:$0xff]
        %v994 = vld [vmem:[%s351 + $0x80] sm:$0xff]
        %v995 = vld [vmem:[%s351 + $0x88] sm:$0xff]
        %v996 = vld [vmem:[%s351 + $0x90] sm:$0xff]
        %v997 = vld [vmem:[%s351 + $0x98] sm:$0xff]
        %v998 = vld [vmem:[%s351 + $0xa0] sm:$0xff]
        %v999 = vld [vmem:[%s351 + $0xa8] sm:$0xff]
        %v1000 = vld [vmem:[%s351 + $0xb0] sm:$0xff]
        %v1001 = vld [vmem:[%s351 + $0xb8] sm:$0xff]
        %v1002 = vld [vmem:[%s351 + $0xc0] sm:$0xff]
        %v1003 = vld [vmem:[%s351 + $0xc8] sm:$0xff]
        %v1004 = vld [vmem:[%s351 + $0xd0] sm:$0xff]
        %v1005 = vld [vmem:[%s351 + $0xd8] sm:$0xff]
        %v1006 = vld [vmem:[%s351 + $0xe0] sm:$0xff]
        %v1007 = vld [vmem:[%s351 + $0xe8] sm:$0xff]
        %v1008 = vld [vmem:[%s351 + $0xf0] sm:$0xff]
        %v1009 = vld [vmem:[%s351 + $0xf8] sm:$0xff]
        %1011 = vset.pattern.permute.xlu0 0
        %1012 = vperm.xlu0 %1011, %v978
        %v1013 = vpop.permute.xlu0 %1012
        %1016 = vset.pattern.permute.xlu0 0
        %1017 = vperm.xlu0 %1016, %v979
        %v1018 = vpop.permute.xlu0 %1017
        %1021 = vset.pattern.permute.xlu0 0
        %1022 = vperm.xlu0 %1021, %v980
        %v1023 = vpop.permute.xlu0 %1022
        %1026 = vset.pattern.permute.xlu0 0
        %1027 = vperm.xlu0 %1026, %v981
        %v1028 = vpop.permute.xlu0 %1027
        %1031 = vset.pattern.permute.xlu0 0
        %1032 = vperm.xlu0 %1031, %v982
        %v1033 = vpop.permute.xlu0 %1032
        %1036 = vset.pattern.permute.xlu0 0
        %1037 = vperm.xlu0 %1036, %v983
        %v1038 = vpop.permute.xlu0 %1037
        %1041 = vset.pattern.permute.xlu0 0
        %1042 = vperm.xlu0 %1041, %v984
        %v1043 = vpop.permute.xlu0 %1042
        %1046 = vset.pattern.permute.xlu0 0
        %1047 = vperm.xlu0 %1046, %v985
        %v1048 = vpop.permute.xlu0 %1047
        %1051 = vset.pattern.permute.xlu0 0
        %1052 = vperm.xlu0 %1051, %v986
        %v1053 = vpop.permute.xlu0 %1052
        %1056 = vset.pattern.permute.xlu0 0
        %1057 = vperm.xlu0 %1056, %v987
        %v1058 = vpop.permute.xlu0 %1057
        %1061 = vset.pattern.permute.xlu0 0
        %1062 = vperm.xlu0 %1061, %v988
        %v1063 = vpop.permute.xlu0 %1062
        %1066 = vset.pattern.permute.xlu0 0
        %1067 = vperm.xlu0 %1066, %v989
        %v1068 = vpop.permute.xlu0 %1067
        %1071 = vset.pattern.permute.xlu0 0
        %1072 = vperm.xlu0 %1071, %v990
        %v1073 = vpop.permute.xlu0 %1072
        %1076 = vset.pattern.permute.xlu0 0
        %1077 = vperm.xlu0 %1076, %v991
        %v1078 = vpop.permute.xlu0 %1077
        %1081 = vset.pattern.permute.xlu0 0
        %1082 = vperm.xlu0 %1081, %v992
        %v1083 = vpop.permute.xlu0 %1082
        %1086 = vset.pattern.permute.xlu0 0
        %1087 = vperm.xlu0 %1086, %v993
        %v1088 = vpop.permute.xlu0 %1087
        %1091 = vset.pattern.permute.xlu0 0
        %1092 = vperm.xlu0 %1091, %v994
        %v1093 = vpop.permute.xlu0 %1092
        %1096 = vset.pattern.permute.xlu0 0
        %1097 = vperm.xlu0 %1096, %v995
        %v1098 = vpop.permute.xlu0 %1097
        %1101 = vset.pattern.permute.xlu0 0
        %1102 = vperm.xlu0 %1101, %v996
        %v1103 = vpop.permute.xlu0 %1102
        %1106 = vset.pattern.permute.xlu0 0
        %1107 = vperm.xlu0 %1106, %v997
        %v1108 = vpop.permute.xlu0 %1107
        %1111 = vset.pattern.permute.xlu0 0
        %1112 = vperm.xlu0 %1111, %v998
        %v1113 = vpop.permute.xlu0 %1112
        %1116 = vset.pattern.permute.xlu0 0
        %1117 = vperm.xlu0 %1116, %v999
        %v1118 = vpop.permute.xlu0 %1117
        %1121 = vset.pattern.permute.xlu0 0
        %1122 = vperm.xlu0 %1121, %v1000
        %v1123 = vpop.permute.xlu0 %1122
        %1126 = vset.pattern.permute.xlu0 0
        %1127 = vperm.xlu0 %1126, %v1001
        %v1128 = vpop.permute.xlu0 %1127
        %1131 = vset.pattern.permute.xlu0 0
        %1132 = vperm.xlu0 %1131, %v1002
        %v1133 = vpop.permute.xlu0 %1132
        %1136 = vset.pattern.permute.xlu0 0
        %1137 = vperm.xlu0 %1136, %v1003
        %v1138 = vpop.permute.xlu0 %1137
        %1141 = vset.pattern.permute.xlu0 0
        %1142 = vperm.xlu0 %1141, %v1004
        %v1143 = vpop.permute.xlu0 %1142
        %1146 = vset.pattern.permute.xlu0 0
        %1147 = vperm.xlu0 %1146, %v1005
        %v1148 = vpop.permute.xlu0 %1147
        %1151 = vset.pattern.permute.xlu0 0
        %1152 = vperm.xlu0 %1151, %v1006
        %v1153 = vpop.permute.xlu0 %1152
        %1156 = vset.pattern.permute.xlu0 0
        %1157 = vperm.xlu0 %1156, %v1007
        %v1158 = vpop.permute.xlu0 %1157
        %1161 = vset.pattern.permute.xlu0 0
        %1162 = vperm.xlu0 %1161, %v1008
        %v1163 = vpop.permute.xlu0 %1162
        %1166 = vset.pattern.permute.xlu0 0
        %1167 = vperm.xlu0 %1166, %v1009
        %v1168 = vpop.permute.xlu0 %1167
        %v1170 = vmul.f32 %v946, %v1013
        %v1171 = vmul.f32 %v947, %v1018
        %v1172 = vmul.f32 %v948, %v1023
        %v1173 = vmul.f32 %v949, %v1028
        %v1174 = vmul.f32 %v950, %v1033
        %v1175 = vmul.f32 %v951, %v1038
        %v1176 = vmul.f32 %v952, %v1043
        %v1177 = vmul.f32 %v953, %v1048
        %v1178 = vmul.f32 %v954, %v1053
        %v1179 = vmul.f32 %v955, %v1058
        %v1180 = vmul.f32 %v956, %v1063
        %v1181 = vmul.f32 %v957, %v1068
        %v1182 = vmul.f32 %v958, %v1073
        %v1183 = vmul.f32 %v959, %v1078
        %v1184 = vmul.f32 %v960, %v1083
        %v1185 = vmul.f32 %v961, %v1088
        %v1186 = vmul.f32 %v962, %v1093
        %v1187 = vmul.f32 %v963, %v1098
        %v1188 = vmul.f32 %v964, %v1103
        %v1189 = vmul.f32 %v965, %v1108
        %v1190 = vmul.f32 %v966, %v1113
        %v1191 = vmul.f32 %v967, %v1118
        %v1192 = vmul.f32 %v968, %v1123
        %v1193 = vmul.f32 %v969, %v1128
        %v1194 = vmul.f32 %v970, %v1133
        %v1195 = vmul.f32 %v971, %v1138
        %v1196 = vmul.f32 %v972, %v1143
        %v1197 = vmul.f32 %v973, %v1148
        %v1198 = vmul.f32 %v974, %v1153
        %v1199 = vmul.f32 %v975, %v1158
        %v1200 = vmul.f32 %v976, %v1163
        %v1201 = vmul.f32 %v977, %v1168
        %1202 = vadd.xlane.f32.xlu0 %v1170
        %v1203 = vpop.xlane.xlu0 %1202
        %1204 = vadd.xlane.f32.xlu0 %v1171
        %v1205 = vpop.xlane.xlu0 %1204
        %1206 = vadd.xlane.f32.xlu0 %v1172
        %v1207 = vpop.xlane.xlu0 %1206
        %1208 = vadd.xlane.f32.xlu0 %v1173
        %v1209 = vpop.xlane.xlu0 %1208
        %1210 = vadd.xlane.f32.xlu0 %v1174
        %v1211 = vpop.xlane.xlu0 %1210
        %1212 = vadd.xlane.f32.xlu0 %v1175
        %v1213 = vpop.xlane.xlu0 %1212
        %1214 = vadd.xlane.f32.xlu0 %v1176
        %v1215 = vpop.xlane.xlu0 %1214
        %1216 = vadd.xlane.f32.xlu0 %v1177
        %v1217 = vpop.xlane.xlu0 %1216
        %1218 = vadd.xlane.f32.xlu0 %v1178
        %v1219 = vpop.xlane.xlu0 %1218
        %1220 = vadd.xlane.f32.xlu0 %v1179
        %v1221 = vpop.xlane.xlu0 %1220
        %1222 = vadd.xlane.f32.xlu0 %v1180
        %v1223 = vpop.xlane.xlu0 %1222
        %1224 = vadd.xlane.f32.xlu0 %v1181
        %v1225 = vpop.xlane.xlu0 %1224
        %1226 = vadd.xlane.f32.xlu0 %v1182
        %v1227 = vpop.xlane.xlu0 %1226
        %1228 = vadd.xlane.f32.xlu0 %v1183
        %v1229 = vpop.xlane.xlu0 %1228
        %1230 = vadd.xlane.f32.xlu0 %v1184
        %v1231 = vpop.xlane.xlu0 %1230
        %1232 = vadd.xlane.f32.xlu0 %v1185
        %v1233 = vpop.xlane.xlu0 %1232
        %1234 = vadd.xlane.f32.xlu0 %v1186
        %v1235 = vpop.xlane.xlu0 %1234
        %1236 = vadd.xlane.f32.xlu0 %v1187
        %v1237 = vpop.xlane.xlu0 %1236
        %1238 = vadd.xlane.f32.xlu0 %v1188
        %v1239 = vpop.xlane.xlu0 %1238
        %1240 = vadd.xlane.f32.xlu0 %v1189
        %v1241 = vpop.xlane.xlu0 %1240
        %1242 = vadd.xlane.f32.xlu0 %v1190
        %v1243 = vpop.xlane.xlu0 %1242
        %1244 = vadd.xlane.f32.xlu0 %v1191
        %v1245 = vpop.xlane.xlu0 %1244
        %1246 = vadd.xlane.f32.xlu0 %v1192
        %v1247 = vpop.xlane.xlu0 %1246
        %1248 = vadd.xlane.f32.xlu0 %v1193
        %v1249 = vpop.xlane.xlu0 %1248
        %1250 = vadd.xlane.f32.xlu0 %v1194
        %v1251 = vpop.xlane.xlu0 %1250
        %1252 = vadd.xlane.f32.xlu0 %v1195
        %v1253 = vpop.xlane.xlu0 %1252
        %1254 = vadd.xlane.f32.xlu0 %v1196
        %v1255 = vpop.xlane.xlu0 %1254
        %1256 = vadd.xlane.f32.xlu0 %v1197
        %v1257 = vpop.xlane.xlu0 %1256
        %1258 = vadd.xlane.f32.xlu0 %v1198
        %v1259 = vpop.xlane.xlu0 %1258
        %1260 = vadd.xlane.f32.xlu0 %v1199
        %v1261 = vpop.xlane.xlu0 %1260
        %1262 = vadd.xlane.f32.xlu0 %v1200
        %v1263 = vpop.xlane.xlu0 %1262
        %1264 = vadd.xlane.f32.xlu0 %v1201
        %v1265 = vpop.xlane.xlu0 %1264
        %v1266 = vrcp.pop 128.0
        %v1267 = vmul.f32 %v1203, %v1266
        %v1268 = vmul.f32 %v1205, %v1266
        %v1269 = vmul.f32 %v1207, %v1266
        %v1270 = vmul.f32 %v1209, %v1266
        %v1271 = vmul.f32 %v1211, %v1266
        %v1272 = vmul.f32 %v1213, %v1266
        %v1273 = vmul.f32 %v1215, %v1266
        %v1274 = vmul.f32 %v1217, %v1266
        %v1275 = vmul.f32 %v1219, %v1266
        %v1276 = vmul.f32 %v1221, %v1266
        %v1277 = vmul.f32 %v1223, %v1266
        %v1278 = vmul.f32 %v1225, %v1266
        %v1279 = vmul.f32 %v1227, %v1266
        %v1280 = vmul.f32 %v1229, %v1266
        %v1281 = vmul.f32 %v1231, %v1266
        %v1282 = vmul.f32 %v1233, %v1266
        %v1283 = vmul.f32 %v1235, %v1266
        %v1284 = vmul.f32 %v1237, %v1266
        %v1285 = vmul.f32 %v1239, %v1266
        %v1286 = vmul.f32 %v1241, %v1266
        %v1287 = vmul.f32 %v1243, %v1266
        %v1288 = vmul.f32 %v1245, %v1266
        %v1289 = vmul.f32 %v1247, %v1266
        %v1290 = vmul.f32 %v1249, %v1266
        %v1291 = vmul.f32 %v1251, %v1266
        %v1292 = vmul.f32 %v1253, %v1266
        %v1293 = vmul.f32 %v1255, %v1266
        %v1294 = vmul.f32 %v1257, %v1266
        %v1295 = vmul.f32 %v1259, %v1266
        %v1296 = vmul.f32 %v1261, %v1266
        %v1297 = vmul.f32 %v1263, %v1266
        %v1298 = vmul.f32 %v1265, %v1266
        %v1299 = vsub.f32 %v1170, %v1267
        %v1300 = vsub.f32 %v1171, %v1268
        %v1301 = vsub.f32 %v1172, %v1269
        %v1302 = vsub.f32 %v1173, %v1270
        %v1303 = vsub.f32 %v1174, %v1271
        %v1304 = vsub.f32 %v1175, %v1272
        %v1305 = vsub.f32 %v1176, %v1273
        %v1306 = vsub.f32 %v1177, %v1274
        %v1307 = vsub.f32 %v1178, %v1275
        %v1308 = vsub.f32 %v1179, %v1276
        %v1309 = vsub.f32 %v1180, %v1277
        %v1310 = vsub.f32 %v1181, %v1278
        %v1311 = vsub.f32 %v1182, %v1279
        %v1312 = vsub.f32 %v1183, %v1280
        %v1313 = vsub.f32 %v1184, %v1281
        %v1314 = vsub.f32 %v1185, %v1282
        %v1315 = vsub.f32 %v1186, %v1283
        %v1316 = vsub.f32 %v1187, %v1284
        %v1317 = vsub.f32 %v1188, %v1285
        %v1318 = vsub.f32 %v1189, %v1286
        %v1319 = vsub.f32 %v1190, %v1287
        %v1320 = vsub.f32 %v1191, %v1288
        %v1321 = vsub.f32 %v1192, %v1289
        %v1322 = vsub.f32 %v1193, %v1290
        %v1323 = vsub.f32 %v1194, %v1291
        %v1324 = vsub.f32 %v1195, %v1292
        %v1325 = vsub.f32 %v1196, %v1293
        %v1326 = vsub.f32 %v1197, %v1294
        %v1327 = vsub.f32 %v1198, %v1295
        %v1328 = vsub.f32 %v1199, %v1296
        %v1329 = vsub.f32 %v1200, %v1297
        %v1330 = vsub.f32 %v1201, %v1298
        %v1331 = vmul.f32 %v1299, %v1299
        %v1332 = vmul.f32 %v1300, %v1300
        %v1333 = vmul.f32 %v1301, %v1301
        %v1334 = vmul.f32 %v1302, %v1302
        %v1335 = vmul.f32 %v1303, %v1303
        %v1336 = vmul.f32 %v1304, %v1304
        %v1337 = vmul.f32 %v1305, %v1305
        %v1338 = vmul.f32 %v1306, %v1306
        %v1339 = vmul.f32 %v1307, %v1307
        %v1340 = vmul.f32 %v1308, %v1308
        %v1341 = vmul.f32 %v1309, %v1309
        %v1342 = vmul.f32 %v1310, %v1310
        %v1343 = vmul.f32 %v1311, %v1311
        %v1344 = vmul.f32 %v1312, %v1312
        %v1345 = vmul.f32 %v1313, %v1313
        %v1346 = vmul.f32 %v1314, %v1314
        %v1347 = vmul.f32 %v1315, %v1315
        %v1348 = vmul.f32 %v1316, %v1316
        %v1349 = vmul.f32 %v1317, %v1317
        %v1350 = vmul.f32 %v1318, %v1318
        %v1351 = vmul.f32 %v1319, %v1319
        %v1352 = vmul.f32 %v1320, %v1320
        %v1353 = vmul.f32 %v1321, %v1321
        %v1354 = vmul.f32 %v1322, %v1322
        %v1355 = vmul.f32 %v1323, %v1323
        %v1356 = vmul.f32 %v1324, %v1324
        %v1357 = vmul.f32 %v1325, %v1325
        %v1358 = vmul.f32 %v1326, %v1326
        %v1359 = vmul.f32 %v1327, %v1327
        %v1360 = vmul.f32 %v1328, %v1328
        %v1361 = vmul.f32 %v1329, %v1329
        %v1362 = vmul.f32 %v1330, %v1330
        %1363 = vadd.xlane.f32.xlu0 %v1331
        %v1364 = vpop.xlane.xlu0 %1363
        %1365 = vadd.xlane.f32.xlu0 %v1332
        %v1366 = vpop.xlane.xlu0 %1365
        %1367 = vadd.xlane.f32.xlu0 %v1333
        %v1368 = vpop.xlane.xlu0 %1367
        %1369 = vadd.xlane.f32.xlu0 %v1334
        %v1370 = vpop.xlane.xlu0 %1369
        %1371 = vadd.xlane.f32.xlu0 %v1335
        %v1372 = vpop.xlane.xlu0 %1371
        %1373 = vadd.xlane.f32.xlu0 %v1336
        %v1374 = vpop.xlane.xlu0 %1373
        %1375 = vadd.xlane.f32.xlu0 %v1337
        %v1376 = vpop.xlane.xlu0 %1375
        %1377 = vadd.xlane.f32.xlu0 %v1338
        %v1378 = vpop.xlane.xlu0 %1377
        %1379 = vadd.xlane.f32.xlu0 %v1339
        %v1380 = vpop.xlane.xlu0 %1379
        %1381 = vadd.xlane.f32.xlu0 %v1340
        %v1382 = vpop.xlane.xlu0 %1381
        %1383 = vadd.xlane.f32.xlu0 %v1341
        %v1384 = vpop.xlane.xlu0 %1383
        %1385 = vadd.xlane.f32.xlu0 %v1342
        %v1386 = vpop.xlane.xlu0 %1385
        %1387 = vadd.xlane.f32.xlu0 %v1343
        %v1388 = vpop.xlane.xlu0 %1387
        %1389 = vadd.xlane.f32.xlu0 %v1344
        %v1390 = vpop.xlane.xlu0 %1389
        %1391 = vadd.xlane.f32.xlu0 %v1345
        %v1392 = vpop.xlane.xlu0 %1391
        %1393 = vadd.xlane.f32.xlu0 %v1346
        %v1394 = vpop.xlane.xlu0 %1393
        %1395 = vadd.xlane.f32.xlu0 %v1347
        %v1396 = vpop.xlane.xlu0 %1395
        %1397 = vadd.xlane.f32.xlu0 %v1348
        %v1398 = vpop.xlane.xlu0 %1397
        %1399 = vadd.xlane.f32.xlu0 %v1349
        %v1400 = vpop.xlane.xlu0 %1399
        %1401 = vadd.xlane.f32.xlu0 %v1350
        %v1402 = vpop.xlane.xlu0 %1401
        %1403 = vadd.xlane.f32.xlu0 %v1351
        %v1404 = vpop.xlane.xlu0 %1403
        %1405 = vadd.xlane.f32.xlu0 %v1352
        %v1406 = vpop.xlane.xlu0 %1405
        %1407 = vadd.xlane.f32.xlu0 %v1353
        %v1408 = vpop.xlane.xlu0 %1407
        %1409 = vadd.xlane.f32.xlu0 %v1354
        %v1410 = vpop.xlane.xlu0 %1409
        %1411 = vadd.xlane.f32.xlu0 %v1355
        %v1412 = vpop.xlane.xlu0 %1411
        %1413 = vadd.xlane.f32.xlu0 %v1356
        %v1414 = vpop.xlane.xlu0 %1413
        %1415 = vadd.xlane.f32.xlu0 %v1357
        %v1416 = vpop.xlane.xlu0 %1415
        %1417 = vadd.xlane.f32.xlu0 %v1358
        %v1418 = vpop.xlane.xlu0 %1417
        %1419 = vadd.xlane.f32.xlu0 %v1359
        %v1420 = vpop.xlane.xlu0 %1419
        %1421 = vadd.xlane.f32.xlu0 %v1360
        %v1422 = vpop.xlane.xlu0 %1421
        %1423 = vadd.xlane.f32.xlu0 %v1361
        %v1424 = vpop.xlane.xlu0 %1423
        %1425 = vadd.xlane.f32.xlu0 %v1362
        %v1426 = vpop.xlane.xlu0 %1425
        %v1427 = vmul.f32 %v1364, %v1266
        %v1428 = vmul.f32 %v1366, %v1266
        %v1429 = vmul.f32 %v1368, %v1266
        %v1430 = vmul.f32 %v1370, %v1266
        %v1431 = vmul.f32 %v1372, %v1266
        %v1432 = vmul.f32 %v1374, %v1266
        %v1433 = vmul.f32 %v1376, %v1266
        %v1434 = vmul.f32 %v1378, %v1266
        %v1435 = vmul.f32 %v1380, %v1266
        %v1436 = vmul.f32 %v1382, %v1266
        %v1437 = vmul.f32 %v1384, %v1266
        %v1438 = vmul.f32 %v1386, %v1266
        %v1439 = vmul.f32 %v1388, %v1266
        %v1440 = vmul.f32 %v1390, %v1266
        %v1441 = vmul.f32 %v1392, %v1266
        %v1442 = vmul.f32 %v1394, %v1266
        %v1443 = vmul.f32 %v1396, %v1266
        %v1444 = vmul.f32 %v1398, %v1266
        %v1445 = vmul.f32 %v1400, %v1266
        %v1446 = vmul.f32 %v1402, %v1266
        %v1447 = vmul.f32 %v1404, %v1266
        %v1448 = vmul.f32 %v1406, %v1266
        %v1449 = vmul.f32 %v1408, %v1266
        %v1450 = vmul.f32 %v1410, %v1266
        %v1451 = vmul.f32 %v1412, %v1266
        %v1452 = vmul.f32 %v1414, %v1266
        %v1453 = vmul.f32 %v1416, %v1266
        %v1454 = vmul.f32 %v1418, %v1266
        %v1455 = vmul.f32 %v1420, %v1266
        %v1456 = vmul.f32 %v1422, %v1266
        %v1457 = vmul.f32 %v1424, %v1266
        %v1458 = vmul.f32 %v1426, %v1266
        %v1459 = vadd.f32 %v1427, 1e-05
        %v1460 = vadd.f32 %v1428, 1e-05
        %v1461 = vadd.f32 %v1429, 1e-05
        %v1462 = vadd.f32 %v1430, 1e-05
        %v1463 = vadd.f32 %v1431, 1e-05
        %v1464 = vadd.f32 %v1432, 1e-05
        %v1465 = vadd.f32 %v1433, 1e-05
        %v1466 = vadd.f32 %v1434, 1e-05
        %v1467 = vadd.f32 %v1435, 1e-05
        %v1468 = vadd.f32 %v1436, 1e-05
        %v1469 = vadd.f32 %v1437, 1e-05
        %v1470 = vadd.f32 %v1438, 1e-05
        %v1471 = vadd.f32 %v1439, 1e-05
        %v1472 = vadd.f32 %v1440, 1e-05
        %v1473 = vadd.f32 %v1441, 1e-05
        %v1474 = vadd.f32 %v1442, 1e-05
        %v1475 = vadd.f32 %v1443, 1e-05
        %v1476 = vadd.f32 %v1444, 1e-05
        %v1477 = vadd.f32 %v1445, 1e-05
        %v1478 = vadd.f32 %v1446, 1e-05
        %v1479 = vadd.f32 %v1447, 1e-05
        %v1480 = vadd.f32 %v1448, 1e-05
        %v1481 = vadd.f32 %v1449, 1e-05
        %v1482 = vadd.f32 %v1450, 1e-05
        %v1483 = vadd.f32 %v1451, 1e-05
        %v1484 = vadd.f32 %v1452, 1e-05
        %v1485 = vadd.f32 %v1453, 1e-05
        %v1486 = vadd.f32 %v1454, 1e-05
        %v1487 = vadd.f32 %v1455, 1e-05
        %v1488 = vadd.f32 %v1456, 1e-05
        %v1489 = vadd.f32 %v1457, 1e-05
        %v1490 = vadd.f32 %v1458, 1e-05
        %v1491 = vrsqrt.pop %v1459
        %v1492 = vrsqrt.pop %v1460
        %v1493 = vrsqrt.pop %v1461
        %v1494 = vrsqrt.pop %v1462
        %v1495 = vrsqrt.pop %v1463
        %v1496 = vrsqrt.pop %v1464
        %v1497 = vrsqrt.pop %v1465
        %v1498 = vrsqrt.pop %v1466
        %v1499 = vrsqrt.pop %v1467
        %v1500 = vrsqrt.pop %v1468
        %v1501 = vrsqrt.pop %v1469
        %v1502 = vrsqrt.pop %v1470
        %v1503 = vrsqrt.pop %v1471
        %v1504 = vrsqrt.pop %v1472
        %v1505 = vrsqrt.pop %v1473
        %v1506 = vrsqrt.pop %v1474
        %v1507 = vrsqrt.pop %v1475
        %v1508 = vrsqrt.pop %v1476
        %v1509 = vrsqrt.pop %v1477
        %v1510 = vrsqrt.pop %v1478
        %v1511 = vrsqrt.pop %v1479
        %v1512 = vrsqrt.pop %v1480
        %v1513 = vrsqrt.pop %v1481
        %v1514 = vrsqrt.pop %v1482
        %v1515 = vrsqrt.pop %v1483
        %v1516 = vrsqrt.pop %v1484
        %v1517 = vrsqrt.pop %v1485
        %v1518 = vrsqrt.pop %v1486
        %v1519 = vrsqrt.pop %v1487
        %v1520 = vrsqrt.pop %v1488
        %v1521 = vrsqrt.pop %v1489
        %v1522 = vrsqrt.pop %v1490
        %v1523 = vmul.f32 %v1299, %v1491
        %v1524 = vmul.f32 %v1300, %v1492
        %v1525 = vmul.f32 %v1301, %v1493
        %v1526 = vmul.f32 %v1302, %v1494
        %v1527 = vmul.f32 %v1303, %v1495
        %v1528 = vmul.f32 %v1304, %v1496
        %v1529 = vmul.f32 %v1305, %v1497
        %v1530 = vmul.f32 %v1306, %v1498
        %v1531 = vmul.f32 %v1307, %v1499
        %v1532 = vmul.f32 %v1308, %v1500
        %v1533 = vmul.f32 %v1309, %v1501
        %v1534 = vmul.f32 %v1310, %v1502
        %v1535 = vmul.f32 %v1311, %v1503
        %v1536 = vmul.f32 %v1312, %v1504
        %v1537 = vmul.f32 %v1313, %v1505
        %v1538 = vmul.f32 %v1314, %v1506
        %v1539 = vmul.f32 %v1315, %v1507
        %v1540 = vmul.f32 %v1316, %v1508
        %v1541 = vmul.f32 %v1317, %v1509
        %v1542 = vmul.f32 %v1318, %v1510
        %v1543 = vmul.f32 %v1319, %v1511
        %v1544 = vmul.f32 %v1320, %v1512
        %v1545 = vmul.f32 %v1321, %v1513
        %v1546 = vmul.f32 %v1322, %v1514
        %v1547 = vmul.f32 %v1323, %v1515
        %v1548 = vmul.f32 %v1324, %v1516
        %v1549 = vmul.f32 %v1325, %v1517
        %v1550 = vmul.f32 %v1326, %v1518
        %v1551 = vmul.f32 %v1327, %v1519
        %v1552 = vmul.f32 %v1328, %v1520
        %v1553 = vmul.f32 %v1329, %v1521
        %v1554 = vmul.f32 %v1330, %v1522
        %v1555 = vld [vmem:[%s4] sm:$0x1]
        %v1557 = vlaneseq
        %v1558 = vshrl.u32 %v1557, 7
        %v1559 = vsub.s32 0, %v1558
        %v1560 = vrot.slane %v1555, %v1559
        %v1562 = vmul.f32 %v1523, %v1560
        %v1563 = vmul.f32 %v1524, %v1560
        %v1564 = vmul.f32 %v1525, %v1560
        %v1565 = vmul.f32 %v1526, %v1560
        %v1566 = vmul.f32 %v1527, %v1560
        %v1567 = vmul.f32 %v1528, %v1560
        %v1568 = vmul.f32 %v1529, %v1560
        %v1569 = vmul.f32 %v1530, %v1560
        %v1570 = vmul.f32 %v1531, %v1560
        %v1571 = vmul.f32 %v1532, %v1560
        %v1572 = vmul.f32 %v1533, %v1560
        %v1573 = vmul.f32 %v1534, %v1560
        %v1574 = vmul.f32 %v1535, %v1560
        %v1575 = vmul.f32 %v1536, %v1560
        %v1576 = vmul.f32 %v1537, %v1560
        %v1577 = vmul.f32 %v1538, %v1560
        %v1578 = vmul.f32 %v1539, %v1560
        %v1579 = vmul.f32 %v1540, %v1560
        %v1580 = vmul.f32 %v1541, %v1560
        %v1581 = vmul.f32 %v1542, %v1560
        %v1582 = vmul.f32 %v1543, %v1560
        %v1583 = vmul.f32 %v1544, %v1560
        %v1584 = vmul.f32 %v1545, %v1560
        %v1585 = vmul.f32 %v1546, %v1560
        %v1586 = vmul.f32 %v1547, %v1560
        %v1587 = vmul.f32 %v1548, %v1560
        %v1588 = vmul.f32 %v1549, %v1560
        %v1589 = vmul.f32 %v1550, %v1560
        %v1590 = vmul.f32 %v1551, %v1560
        %v1591 = vmul.f32 %v1552, %v1560
        %v1592 = vmul.f32 %v1553, %v1560
        %v1593 = vmul.f32 %v1554, %v1560
        %v1594 = vld [vmem:[%s5] sm:$0x1]
        %v1596 = vlaneseq
        %v1597 = vshrl.u32 %v1596, 7
        %v1598 = vsub.s32 0, %v1597
        %v1599 = vrot.slane %v1594, %v1598
        %v1601 = vadd.f32 %v1562, %v1599
        %v1602 = vadd.f32 %v1563, %v1599
        %v1603 = vadd.f32 %v1564, %v1599
        %v1604 = vadd.f32 %v1565, %v1599
        %v1605 = vadd.f32 %v1566, %v1599
        %v1606 = vadd.f32 %v1567, %v1599
        %v1607 = vadd.f32 %v1568, %v1599
        %v1608 = vadd.f32 %v1569, %v1599
        %v1609 = vadd.f32 %v1570, %v1599
        %v1610 = vadd.f32 %v1571, %v1599
        %v1611 = vadd.f32 %v1572, %v1599
        %v1612 = vadd.f32 %v1573, %v1599
        %v1613 = vadd.f32 %v1574, %v1599
        %v1614 = vadd.f32 %v1575, %v1599
        %v1615 = vadd.f32 %v1576, %v1599
        %v1616 = vadd.f32 %v1577, %v1599
        %v1617 = vadd.f32 %v1578, %v1599
        %v1618 = vadd.f32 %v1579, %v1599
        %v1619 = vadd.f32 %v1580, %v1599
        %v1620 = vadd.f32 %v1581, %v1599
        %v1621 = vadd.f32 %v1582, %v1599
        %v1622 = vadd.f32 %v1583, %v1599
        %v1623 = vadd.f32 %v1584, %v1599
        %v1624 = vadd.f32 %v1585, %v1599
        %v1625 = vadd.f32 %v1586, %v1599
        %v1626 = vadd.f32 %v1587, %v1599
        %v1627 = vadd.f32 %v1588, %v1599
        %v1628 = vadd.f32 %v1589, %v1599
        %v1629 = vadd.f32 %v1590, %v1599
        %v1630 = vadd.f32 %v1591, %v1599
        %v1631 = vadd.f32 %v1592, %v1599
        %v1632 = vadd.f32 %v1593, %v1599
        %1633 = vxpose.xlu0.b32.start [1/16] %v1601, 128
        %1634 = vxpose.xlu0.b32.cont [2/16] %v1602, 128
        %1635 = vxpose.xlu0.b32.cont [3/16] %v1603, 128
        %1636 = vxpose.xlu0.b32.cont [4/16] %v1604, 128
        %1637 = vxpose.xlu0.b32.cont [5/16] %v1605, 128
        %1638 = vxpose.xlu0.b32.cont [6/16] %v1606, 128
        %1639 = vxpose.xlu0.b32.cont [7/16] %v1607, 128
        %1640 = vxpose.xlu0.b32.cont [8/16] %v1608, 128
        %1641 = vxpose.xlu0.b32.cont [9/16] %v1609, 128
        %1642 = vxpose.xlu0.b32.cont [10/16] %v1610, 128
        %1643 = vxpose.xlu0.b32.cont [11/16] %v1611, 128
        %1644 = vxpose.xlu0.b32.cont [12/16] %v1612, 128
        %1645 = vxpose.xlu0.b32.cont [13/16] %v1613, 128
        %1646 = vxpose.xlu0.b32.cont [14/16] %v1614, 128
        %1647 = vxpose.xlu0.b32.cont [15/16] %v1615, 128
        %1648 = vxpose.xlu0.b32.end [16/16] %v1616, 128
        %v1649 = vpop.trf.xlu0
        %v1650 = vpop.trf.xlu0
        %v1651 = vpop.trf.xlu0
        %v1652 = vpop.trf.xlu0
        %v1653 = vpop.trf.xlu0
        %v1654 = vpop.trf.xlu0
        %v1655 = vpop.trf.xlu0
        %v1656 = vpop.trf.xlu0
        %v1657 = vpop.trf.xlu0
        %v1658 = vpop.trf.xlu0
        %v1659 = vpop.trf.xlu0
        %v1660 = vpop.trf.xlu0
        %v1661 = vpop.trf.xlu0
        %v1662 = vpop.trf.xlu0
        %v1663 = vpop.trf.xlu0
        %v1664 = vpop.trf.xlu0
        %1665 = vxpose.xlu0.b32.start [1/16] %v1617, 128
        %1666 = vxpose.xlu0.b32.cont [2/16] %v1618, 128
        %1667 = vxpose.xlu0.b32.cont [3/16] %v1619, 128
        %1668 = vxpose.xlu0.b32.cont [4/16] %v1620, 128
        %1669 = vxpose.xlu0.b32.cont [5/16] %v1621, 128
        %1670 = vxpose.xlu0.b32.cont [6/16] %v1622, 128
        %1671 = vxpose.xlu0.b32.cont [7/16] %v1623, 128
        %1672 = vxpose.xlu0.b32.cont [8/16] %v1624, 128
        %1673 = vxpose.xlu0.b32.cont [9/16] %v1625, 128
        %1674 = vxpose.xlu0.b32.cont [10/16] %v1626, 128
        %1675 = vxpose.xlu0.b32.cont [11/16] %v1627, 128
        %1676 = vxpose.xlu0.b32.cont [12/16] %v1628, 128
        %1677 = vxpose.xlu0.b32.cont [13/16] %v1629, 128
        %1678 = vxpose.xlu0.b32.cont [14/16] %v1630, 128
        %1679 = vxpose.xlu0.b32.cont [15/16] %v1631, 128
        %1680 = vxpose.xlu0.b32.end [16/16] %v1632, 128
        %v1681 = vpop.trf.xlu0
        %v1682 = vpop.trf.xlu0
        %v1683 = vpop.trf.xlu0
        %v1684 = vpop.trf.xlu0
        %v1685 = vpop.trf.xlu0
        %v1686 = vpop.trf.xlu0
        %v1687 = vpop.trf.xlu0
        %v1688 = vpop.trf.xlu0
        %v1689 = vpop.trf.xlu0
        %v1690 = vpop.trf.xlu0
        %v1691 = vpop.trf.xlu0
        %v1692 = vpop.trf.xlu0
        %v1693 = vpop.trf.xlu0
        %v1694 = vpop.trf.xlu0
        %v1695 = vpop.trf.xlu0
        %v1696 = vpop.trf.xlu0
        %1697 = vst [vmem:[%s334] sm:$0xff] %v1649
        %1698 = vst [vmem:[%s334 + $0x8] sm:$0xff] %v1681
        %1699 = vst [vmem:[%s334 + $0x10] sm:$0xff] %v1650
        %1700 = vst [vmem:[%s334 + $0x18] sm:$0xff] %v1682
        %1701 = vst [vmem:[%s334 + $0x20] sm:$0xff] %v1651
        %1702 = vst [vmem:[%s334 + $0x28] sm:$0xff] %v1683
        %1703 = vst [vmem:[%s334 + $0x30] sm:$0xff] %v1652
        %1704 = vst [vmem:[%s334 + $0x38] sm:$0xff] %v1684
        %1705 = vst [vmem:[%s334 + $0x40] sm:$0xff] %v1653
        %1706 = vst [vmem:[%s334 + $0x48] sm:$0xff] %v1685
        %1707 = vst [vmem:[%s334 + $0x50] sm:$0xff] %v1654
        %1708 = vst [vmem:[%s334 + $0x58] sm:$0xff] %v1686
        %1709 = vst [vmem:[%s334 + $0x60] sm:$0xff] %v1655
        %1710 = vst [vmem:[%s334 + $0x68] sm:$0xff] %v1687
        %1711 = vst [vmem:[%s334 + $0x70] sm:$0xff] %v1656
        %1712 = vst [vmem:[%s334 + $0x78] sm:$0xff] %v1688
        %1713 = vst [vmem:[%s334 + $0x80] sm:$0xff] %v1657
        %1714 = vst [vmem:[%s334 + $0x88] sm:$0xff] %v1689
        %1715 = vst [vmem:[%s334 + $0x90] sm:$0xff] %v1658
        %1716 = vst [vmem:[%s334 + $0x98] sm:$0xff] %v1690
        %1717 = vst [vmem:[%s334 + $0xa0] sm:$0xff] %v1659
        %1718 = vst [vmem:[%s334 + $0xa8] sm:$0xff] %v1691
        %1719 = vst [vmem:[%s334 + $0xb0] sm:$0xff] %v1660
        %1720 = vst [vmem:[%s334 + $0xb8] sm:$0xff] %v1692
        %1721 = vst [vmem:[%s334 + $0xc0] sm:$0xff] %v1661
        %1722 = vst [vmem:[%s334 + $0xc8] sm:$0xff] %v1693
        %1723 = vst [vmem:[%s334 + $0xd0] sm:$0xff] %v1662
        %1724 = vst [vmem:[%s334 + $0xd8] sm:$0xff] %v1694
        %1725 = vst [vmem:[%s334 + $0xe0] sm:$0xff] %v1663
        %1726 = vst [vmem:[%s334 + $0xe8] sm:$0xff] %v1695
        %1727 = vst [vmem:[%s334 + $0xf0] sm:$0xff] %v1664
        %1728 = vst [vmem:[%s334 + $0xf8] sm:$0xff] %v1696
        %s1729 = sand.u32 %s192, 1
        %s1730 = scalar_lea.sflag [#allocation5], %s1729
        %s1731 = sand.u32 %s192, 1
        %s1732 = smul.addr %s1731, 256
        %s1733 = scalar_lea.vmem [#allocation6], %s1732
        // Predicated region
        $region49: #{tpu_custom_call.1} parent=43 // pred_check
          %p1734 = pneg %p202
        $region50: #{tpu_custom_call.1} parent=43 // pred_check_branch
          %1736 = sbr.rel (%p1734) target = $region52
        $region51: #{tpu_custom_call.1} parent=43 // pred_region
          %s1737 = smul.u32 2, %s28
          %s1739 = ssub.s32 4096, 4096
          %1740 = vsyncadd %s1730, %s1739
          %s1741 = smul.addr %s27, 32
          %s1742 = sadd.s32 %s1737, %s1741
          %s1743 = smul.addr %s1742, 128
          %s1744 = scalar_lea.hbm %s6, %s1743
          %s1745 = sshll.u32 %s1733, 4
          %s1746 = int_to_ptr.vmem [resolvable:$true] %s1745
          %1751 = dma.vmem_to_hbm [thread:$0]  %s1746, 4096, %s1744, %s1730, 256, 256, 16
        $region52: #{tpu_custom_call.1} parent=43 // pred_fallthru
          _
      $region44: #{tpu_custom_call.1} parent=5 // pred_fallthru
        _
      %p1752 = scmp.le.s32.totalorder 2, %s18
      // Predicated region
      $region53: #{tpu_custom_call.1} parent=5 // pred_check
        %p1753 = pneg %p1752
      $region54: #{tpu_custom_call.1} parent=5 // pred_check_branch
        %1755 = sbr.rel (%p1753) target = $region56
      $region55: #{tpu_custom_call.1} parent=5 // pred_region
        %s1756 = ssub.s32 %s18, 2
        // Predicated region
        $region57: #{tpu_custom_call.1} parent=55 // pred_check
          %p1757 = pneg %p208
        $region58: #{tpu_custom_call.1} parent=55 // pred_check_branch
          %1759 = sbr.rel (%p1757) target = $region60
        $region59: #{tpu_custom_call.1} parent=55 // pred_region
          %s1760 = sand.u32 %s193, 1
          %s1761 = scalar_lea.sflag [#allocation5], %s1760
          %s1762 = sand.u32 %s193, 1
          %s1763 = smul.addr %s1762, 256
          %s1764 = scalar_lea.vmem [#allocation6], %s1763
          %1765 = dma.done %s1761, 4096
        $region60: #{tpu_custom_call.1} parent=55 // pred_fallthru
          _
      $region56: #{tpu_custom_call.1} parent=5 // pred_fallthru
        _
    $region6: #{tpu_custom_call.1} parent=1 // loop_footer
      %s22 = sadd.s32 1, %s18
    $region7: #{tpu_custom_call.1} parent=1 // loop_footer_branch
      %17 = sbr.rel target = $region3
    $region8: #{tpu_custom_call.1} parent=1 // loop_exit
      _
    %1766 = vsyncpa [#allocation4], 1
    %s1767 = scalar_lea.sflag [#allocation4], 1
    %1768 = vsyncpa %s1767, 1
    %1769 = vsyncpa [#allocation5], 1
    %s1770 = scalar_lea.sflag [#allocation5], 1
    %1771 = vsyncpa %s1770, 1

</llo_original>
